<compile_context>
chip_gen: v7x
topology: tpu7x:2x2x1
jax: 0.10.0
libtpu: 0.0.40
codegen_flags: <defaults>
</compile_context>

<pallas_src>
import numpy as np
import jax
import jax.numpy as jnp
from jax.experimental import pallas as pl
from jax.experimental.pallas import tpu as pltpu


# -----------------------------------------------------------------------------
# Host-side deterministic operator matrices (float64, cast at the end)
# -----------------------------------------------------------------------------
def _dht_mats(n):
    k = np.arange(n)
    ang = 2.0 * np.pi * np.outer(k, k) / n
    return np.cos(ang), np.sin(ang)


def _bilinear_mat(out_size, in_size):
    # 1-D operator of F.interpolate(mode="bilinear", align_corners=False).
    a = np.zeros((out_size, in_size), np.float64)
    scale = in_size / out_size
    for i in range(out_size):
        src = (i + 0.5) * scale - 0.5
        if src < 0.0:
            src = 0.0
        x0 = min(int(np.floor(src)), in_size - 1)
        x1 = min(x0 + 1, in_size - 1)
        w1 = src - x0
        a[i, x0] += 1.0 - w1
        a[i, x1] += w1
    return a


def _hybrid_operators(h, w, hybpl):
    """Per-image linear spatial operators of the hybrid-pool branch.

    Row-major flattening flat[i*W + j] throughout, so Y = A @ X @ B^T becomes
    y_flat = kron(A, B) @ x_flat.
    """
    h2, w2 = h // 2, w // 2
    hh = hw = hybpl
    cos_h, sin_h = _dht_mats(h)
    cos_w, sin_w = _dht_mats(w)
    cos_ch, sin_ch = _dht_mats(hh)
    cos_cw, sin_cw = _dht_mats(hw)

    # 2-D DHT:  DHT2(x) = Ch x (Cw+Sw) + Sh x (Cw-Sw)
    dht_full = np.kron(cos_h, cos_w + sin_w) + np.kron(sin_h, cos_w - sin_w)
    dht_crop = np.kron(cos_ch, cos_cw + sin_cw) + np.kron(sin_ch, cos_cw - sin_cw)

    r0, c0 = (h - hh) // 2, (w - hw) // 2
    crop = np.zeros((hh * hw, h * w), np.float64)
    for i in range(hh):
        for j in range(hw):
            crop[i * hw + j, (r0 + i) * w + (c0 + j)] = 1.0

    down = np.kron(_bilinear_mat(h2, hh), _bilinear_mat(w2, hw))      # (h2*w2, hh*hw)
    spec = down @ dht_crop @ crop @ dht_full                          # (h2*w2, h*w)
    up = np.kron(_bilinear_mat(hybpl, h2), _bilinear_mat(hybpl, w2))  # (hh*hw, h2*w2)

    # even-row / even-col selector of the 2x2-max field
    msel = np.zeros((h2 * w2, h * w), np.float64)
    for i in range(h2):
        for j in range(w2):
            msel[i * w2 + j, (2 * i) * w + (2 * j)] = 1.0

    # boundary masks for the 25 conv taps (5x5 frame, offsets dh,dw in [-2,2])
    masks = np.zeros((25, h * w), np.float64)
    for t in range(25):
        dh, dw = t // 5 - 2, t % 5 - 2
        for i in range(h):
            for j in range(w):
                if 0 <= i + dh < h and 0 <= j + dw < w:
                    masks[t, i * w + j] = 1.0

    return spec.T, up.T, msel.T, masks   # (HW,H2W2), (H2W2,HW), (HW,H2W2), (25,HW)


def _pack_conv_weights(ws, bs, c_in, k5=5):
    """Embed 1x1 / 3x3 / 5x5 HWIO weights into one (sum(Cout), 25*Cin) matrix.

    Column index = (kh*5 + kw) * Cin + c, matching the im2col row order.
    """
    rows = []
    for w in ws:
        k = w.shape[0]
        off = (k5 - k) // 2
        wp = jnp.pad(w, ((off, k5 - k - off), (off, k5 - k - off), (0, 0), (0, 0)))
        rows.append(jnp.transpose(wp, (3, 0, 1, 2)).reshape(w.shape[-1], k5 * k5 * c_in))
    wall = jnp.concatenate(rows, axis=0)
    ball = jnp.concatenate(list(bs), axis=0)[:, None]
    return wall, ball


# -----------------------------------------------------------------------------
# Fused forward (single pallas_call, batch folded into the lane axis)
# -----------------------------------------------------------------------------
def hybrid_inception_forward(x_nchw, params, hybpl, *,
                             compute_dtype=jnp.bfloat16, batch_chunks=1):
    n, c, h, w = x_nchw.shape
    assert h % 2 == 0 and w % 2 == 0
    assert hybpl == h == w, "channel concat requires hybpl == H == W"
    assert n % batch_chunks == 0
    cn = n // batch_chunks                    # images handled per grid step
    hw_flat = h * w
    h2w2 = (h // 2) * (w // 2)
    l_full = cn * hw_flat                     # lane width per grid step
    l_half = cn * h2w2
    cdt = np.dtype(compute_dtype)
    f32 = jnp.float32

    out3 = (params["w1"].shape[-1] + params["w2"].shape[-1]
            + params["w3"].shape[-1])
    cpad = -(-c // 8) * 8                     # hybrid output channels -> sublane tile
    ctot = out3 + c
    ctot_pad = out3 + cpad

    k_real = 25 * c
    k_pad = -(-k_real // 128) * 128           # clean MXU contraction dim (100 -> 128)

    # ---- constants: packed conv weights + pre-composed spatial operators ----
    wall, ball = _pack_conv_weights(
        [params["w1"], params["w2"], params["w3"]],
        [params["b1"], params["b2"], params["b3"]], c)
    wall = jnp.pad(wall, ((0, 0), (0, k_pad - k_real))).astype(cdt)
    ball = ball.astype(f32)

    specT, upT, mselT, masks = _hybrid_operators(h, w, hybpl)
    eye_cn = np.eye(cn)
    spec_big = jnp.asarray(np.kron(eye_cn, specT), f32)       # (cn*HW, cn*H2W2) f32
    msel_big = jnp.asarray(np.kron(eye_cn, mselT), cdt)       # (cn*HW, cn*H2W2)
    up_big = jnp.asarray(np.kron(eye_cn, upT), cdt)           # (cn*H2W2, cn*HW)
    masks_big = jnp.asarray(np.tile(masks, (1, cn)), f32)     # (25, cn*HW)

    # fused 1x1 channel mix over [maxpool | spectral], rows padded to cpad
    wh_full = jnp.zeros((cpad, 2 * c), f32).at[:c].set(params["wh"].astype(f32))
    bh_full = jnp.zeros((cpad, 1), f32).at[:c, 0].set(params["bh"].astype(f32))

    # channel-major input with the batch folded into the lane axis
    x_cl = jnp.transpose(x_nchw, (1, 0, 2, 3)).reshape(c, n * hw_flat).astype(f32)

    # im2col store granularity: native sublane tile (16 rows bf16 / 8 rows f32)
    sub = 8 * max(1, 4 // cdt.itemsize)
    group = 1
    while (group * c) % sub != 0 and group < 25:
        group += 1
    n_full = (25 // group) * group

    def kernel(x_ref, wc_ref, bc_ref, mk_ref, ms_ref, sp_ref,
               wh_ref, bh_ref, up_ref, o_ref, patches_ref):
        xf = x_ref[...]                        # (C, L) f32, L = cn*H*W
        masks_v = mk_ref[...]                  # (25, L) f32

        def lroll(v, off):                     # lane roll: out[p] = v[p + off]
            # cross-image / boundary wrap positions are zeroed by the masks
            # (im2col) or never selected (2x2 max-pool), so the wrap is benign.
            return v if off == 0 else jnp.roll(v, -off, axis=1)

        # ---- im2col (5x5 halo) with factored row / column shifts -----------
        rowshift = [lroll(xf, (kh - 2) * w) for kh in range(5)]

        def tap(t):
            kh, kw = t // 5, t % 5
            return lroll(rowshift[kh], kw - 2) * masks_v[t:t + 1, :]

        for t0 in range(0, n_full, group):
            blk = [tap(t0 + i) for i in range(group)]
            blk = blk[0] if group == 1 else jnp.concatenate(blk, axis=0)
            patches_ref[t0 * c:(t0 + group) * c, :] = blk.astype(cdt)
        tail_rows = k_pad - n_full * c
        if tail_rows:
            parts = [tap(n_full + i) for i in range(25 - n_full)]
            zpad = tail_rows - (25 - n_full) * c
            if zpad:
                parts.append(jnp.zeros((zpad, l_full), f32))
            blk = parts[0] if len(parts) == 1 else jnp.concatenate(parts, axis=0)
            patches_ref[n_full * c:k_pad, :] = blk.astype(cdt)

        # ---- all three conv branches: ONE (out3, K_pad) @ (K_pad, L) MXU op
        conv = jnp.dot(wc_ref[...], patches_ref[...],
                       preferred_element_type=jnp.float32)
        conv = jnp.maximum(conv + bc_ref[...], 0.0)
        o_ref[0:out3, :] = conv.astype(o_ref.dtype)

        # ---- hybrid pool branch (HybridPool2DInception) ---------------------
        # 2x2 max-pool: two lane rolls + maxima, then one selection matmul
        cm = jnp.maximum(xf, lroll(xf, 1))
        rm = jnp.maximum(cm, lroll(cm, w))
        mp = jnp.dot(rm.astype(cdt), ms_ref[...],
                     preferred_element_type=jnp.float32)         # (C, L/4)
        # spectral pool (DHT2 -> crop -> DHT2 -> bilinear down): one f32 matmul
        spd = jnp.dot(xf, sp_ref[...],
                      preferred_element_type=jnp.float32)        # (C, L/4)
        # fused 1x1 conv over [maxpool | spectral] channels (one matmul) + ReLU
        cat = jnp.concatenate([mp, spd], axis=0)                 # (2C, L/4)
        z = jnp.dot(wh_ref[...], cat,
                    preferred_element_type=jnp.float32) + bh_ref[...]
        y = jnp.maximum(z, 0.0)                                  # (Cpad, L/4)
        # bilinear upsample back to (H, W) for every image at once
        hyb = jnp.dot(y.astype(cdt), up_ref[...],
                      preferred_element_type=jnp.float32)        # (Cpad, L)
        o_ref[out3:out3 + cpad, :] = hyb.astype(o_ref.dtype)

    def const_spec(a):
        nd = a.ndim
        return pl.BlockSpec(a.shape, lambda i, nd=nd: (0,) * nd)

    mats = [wall, ball, masks_big, msel_big, spec_big, wh_full, bh_full, up_big]

    const_bytes = sum(int(np.prod(m.shape)) * m.dtype.itemsize for m in mats)
    x_bytes = c * n * hw_flat * 4
    out_bytes = ctot_pad * n * hw_flat * 4
    blk_bytes = (c + ctot_pad) * l_full * 4
    scratch_bytes = k_pad * l_full * cdt.itemsize
    vmem_needed = 2 * (blk_bytes + const_bytes) + scratch_bytes
    vmem_limit = int(min(64 * 2 ** 20, max(2 * vmem_needed, 16 * 2 ** 20)))

    flops = 2 * out3 * k_pad * n * hw_flat                        # fused conv
    flops += 2 * 2 * c * l_full * l_half * batch_chunks           # maxpool-sel + spectral
    flops += 2 * cpad * (2 * c) * n * h2w2                        # fused 1x1 mix
    flops += 2 * cpad * l_half * l_full * batch_chunks            # bilinear upsample
    cost = pl.CostEstimate(flops=int(flops), transcendentals=0,
                           bytes_accessed=int(x_bytes + const_bytes + out_bytes))

    out2d = pl.pallas_call(
        kernel,
        out_shape=jax.ShapeDtypeStruct((ctot_pad, n * hw_flat), jnp.float32),
        grid=(batch_chunks,),
        in_specs=[pl.BlockSpec((c, l_full), lambda i: (0, i))]
                 + [const_spec(m) for m in mats],
        out_specs=pl.BlockSpec((ctot_pad, l_full), lambda i: (0, i)),
        scratch_shapes=[pltpu.VMEM((k_pad, l_full), cdt)],
        compiler_params=pltpu.CompilerParams(
            dimension_semantics=("parallel",),
            vmem_limit_bytes=vmem_limit),
        cost_estimate=cost,
    )(x_cl, *mats)

    out = out2d.reshape(ctot_pad, n, hybpl, hybpl).transpose(1, 0, 2, 3)
    return out[:, :ctot]


# -----------------------------------------------------------------------------
# Parameter init (deterministic; hybrid 1x1 ConvBlock fixed instead of
# re-randomised every forward as in the reference)
# -----------------------------------------------------------------------------
def init_params(key, c_in, c_out):
    keys = jax.random.split(key, 8)

    def conv_param(k1, k2, ksz, cin, cout):
        bound = 1.0 / np.sqrt(cin * ksz * ksz)
        w = jax.random.uniform(k1, (ksz, ksz, cin, cout), jnp.float32, -bound, bound)
        b = jax.random.uniform(k2, (cout,), jnp.float32, -bound, bound)
        return w, b

    w1, b1 = conv_param(keys[0], keys[1], 1, c_in, c_out)
    w2, b2 = conv_param(keys[2], keys[3], 3, c_in, c_out)
    w3, b3 = conv_param(keys[4], keys[5], 5, c_in, c_out)
    bound = 1.0 / np.sqrt(2 * c_in)
    wh = jax.random.uniform(keys[6], (c_in, 2 * c_in), jnp.float32, -bound, bound)
    bh = jax.random.uniform(keys[7], (c_in,), jnp.float32, -bound, bound)
    return dict(w1=w1, b1=b1, w2=w2, b2=b2, w3=w3, b3=b3, wh=wh, bh=bh)


# -----------------------------------------------------------------------------
# Pure-JAX reference (independent code path: lax.conv, reduce_window, FFT-DHT)
# -----------------------------------------------------------------------------
def _reference_forward(x, params, hybpl):
    n, c, h, w = x.shape
    h2, w2 = h // 2, w // 2

    def conv_relu_ref(w_, b_, pad):
        w_oihw = jnp.transpose(w_, (3, 2, 0, 1))
        y = jax.lax.conv_general_dilated(
            x, w_oihw, window_strides=(1, 1),
            padding=((pad, pad), (pad, pad)),
            dimension_numbers=("NCHW", "OIHW", "NCHW"))
        return jax.nn.relu(y + b_[None, :, None, None])

    y1 = conv_relu_ref(params["w1"], params["b1"], 0)
    y2 = conv_relu_ref(params["w2"], params["b2"], 1)
    y3 = conv_relu_ref(params["w3"], params["b3"], 2)

    mp = jax.lax.reduce_window(x, -jnp.inf, jax.lax.max,
                               (1, 1, 2, 2), (1, 1, 2, 2), "VALID")

    def dht2(v):
        f = jnp.fft.fft2(v, axes=(2, 3))
        return (f.real - f.imag).astype(jnp.float32)

    f = dht2(x)
    r0, c0 = (h - hybpl) // 2, (w - hybpl) // 2
    g = dht2(f[:, :, r0:r0 + hybpl, c0:c0 + hybpl])
    adh = jnp.asarray(_bilinear_mat(h2, hybpl), jnp.float32)
    adw = jnp.asarray(_bilinear_mat(w2, hybpl), jnp.float32)
    spd = jnp.einsum("hp,ncpq,wq->nchw", adh, g, adw)

    cat = jnp.concatenate([mp, spd], axis=1)
    z = jnp.einsum("oc,nchw->nohw", params["wh"], cat) \
        + params["bh"][None, :, None, None]
    yh_small = jax.nn.relu(z)
    auh = jnp.asarray(_bilinear_mat(hybpl, h2), jnp.float32)
    auw = jnp.asarray(_bilinear_mat(hybpl, w2), jnp.float32)
    yh = jnp.einsum("hp,ncpq,wq->nchw", auh, yh_small, auw)

    return jnp.concatenate([y1, y2, y3, yh], axis=1)


if __name__ == "__main__":
    key = jax.random.PRNGKey(0)
    k_x, k_p = jax.random.split(key)
    N, C_IN, H, W = 2, 4, 16, 16
    OUT = 8
    HYBPL = 16   # must equal H == W for the concat to be shape-compatible

    x = jax.random.normal(k_x, (N, C_IN, H, W), jnp.float32)
    params = init_params(k_p, C_IN, OUT)

    y_ref = _reference_forward(x, params, HYBPL)
    out3 = 3 * OUT

    def check(a_full, label):
        assert a_full.shape == (N, 3 * OUT + C_IN, HYBPL, HYBPL), a_full.shape
        assert bool(jnp.all(jnp.isfinite(a_full)))
        # per-branch scales; tolerance covers bf16 MXU operands w/ f32 accum
        for name, a, b in (("conv", a_full[:, :out3], y_ref[:, :out3]),
                           ("hybrid", a_full[:, out3:], y_ref[:, out3:])):
            err = float(jnp.max(jnp.abs(a - b)))
            scale = float(jnp.max(jnp.abs(b))) + 1e-6
            assert err <= 2e-2 * scale + 1e-3, (label, name, err, scale)

    # single fat call (whole batch folded) — preferred on v5e / v6e (1 TC)
    y1 = jax.block_until_ready(hybrid_inception_forward(x, params, HYBPL))
    check(y1, "chunks=1")

    # 2-way "parallel" grid over batch chunks — feeds both TensorCores on v7x
    y2 = jax.block_until_ready(
        hybrid_inception_forward(x, params, HYBPL, batch_chunks=2))
    check(y2, "chunks=2")

    print("KERNEL_OK")
</pallas_src>

<mosaic_0001>
module attributes {stable_mosaic.version = 11 : i64} {
  func.func @kernel(%arg0: i32, %arg1: memref<4x512xf32, #tpu.memory_space<vmem>>, %arg2: memref<24x128xbf16, #tpu.memory_space<vmem>>, %arg3: memref<24x1xf32, #tpu.memory_space<vmem>>, %arg4: memref<25x512xf32, #tpu.memory_space<vmem>>, %arg5: memref<512x128xbf16, #tpu.memory_space<vmem>>, %arg6: memref<512x128xf32, #tpu.memory_space<vmem>>, %arg7: memref<8x8xf32, #tpu.memory_space<vmem>>, %arg8: memref<8x1xf32, #tpu.memory_space<vmem>>, %arg9: memref<128x512xbf16, #tpu.memory_space<vmem>>, %arg10: memref<32x512xf32, #tpu.memory_space<vmem>>, %arg11: memref<128x512xbf16, #tpu.memory_space<vmem>>) attributes {dimension_semantics = [#tpu.dimension_semantics<parallel>], iteration_bounds = array<i64: 1>, scalar_prefetch = 0 : i64, scratch_operands = 1 : i64, tpu.core_type = #tpu.core_type<tc>, window_params = [{transform_indices = @transform_0, window_bounds = array<i64: 4, 512>}, {pipeline_mode = #tpu.pipeline_mode<synchronous>, transform_indices = @transform_1, window_bounds = array<i64: 24, 128>}, {pipeline_mode = #tpu.pipeline_mode<synchronous>, transform_indices = @transform_2, window_bounds = array<i64: 24, 1>}, {pipeline_mode = #tpu.pipeline_mode<synchronous>, transform_indices = @transform_3, window_bounds = array<i64: 25, 512>}, {pipeline_mode = #tpu.pipeline_mode<synchronous>, transform_indices = @transform_4, window_bounds = array<i64: 512, 128>}, {pipeline_mode = #tpu.pipeline_mode<synchronous>, transform_indices = @transform_5, window_bounds = array<i64: 512, 128>}, {pipeline_mode = #tpu.pipeline_mode<synchronous>, transform_indices = @transform_6, window_bounds = array<i64: 8, 8>}, {pipeline_mode = #tpu.pipeline_mode<synchronous>, transform_indices = @transform_7, window_bounds = array<i64: 8, 1>}, {pipeline_mode = #tpu.pipeline_mode<synchronous>, transform_indices = @transform_8, window_bounds = array<i64: 128, 512>}, {transform_indices = @transform_9, window_bounds = array<i64: 32, 512>}]} {
    %c0 = arith.constant 0 : index
    %c0_0 = arith.constant 0 : index
    %0 = vector.load %arg1[%c0, %c0_0] : memref<4x512xf32, #tpu.memory_space<vmem>>, vector<4x512xf32>
    %c0_1 = arith.constant 0 : index
    %c0_2 = arith.constant 0 : index
    %1 = vector.load %arg4[%c0_1, %c0_2] : memref<25x512xf32, #tpu.memory_space<vmem>>, vector<25x512xf32>
    %2 = vector.extract_strided_slice %0 {offsets = [0, 480], sizes = [4, 32], strides = [1, 1]} : vector<4x512xf32> to vector<4x32xf32>
    %3 = vector.extract_strided_slice %0 {offsets = [0, 0], sizes = [4, 480], strides = [1, 1]} : vector<4x512xf32> to vector<4x480xf32>
    %4 = tpu.concatenate %2, %3 in 1 : vector<4x32xf32>, vector<4x480xf32> -> vector<4x512xf32>
    %5 = vector.extract_strided_slice %0 {offsets = [0, 496], sizes = [4, 16], strides = [1, 1]} : vector<4x512xf32> to vector<4x16xf32>
    %6 = vector.extract_strided_slice %0 {offsets = [0, 0], sizes = [4, 496], strides = [1, 1]} : vector<4x512xf32> to vector<4x496xf32>
    %7 = tpu.concatenate %5, %6 in 1 : vector<4x16xf32>, vector<4x496xf32> -> vector<4x512xf32>
    %8 = vector.extract_strided_slice %0 {offsets = [0, 16], sizes = [4, 496], strides = [1, 1]} : vector<4x512xf32> to vector<4x496xf32>
    %9 = vector.extract_strided_slice %0 {offsets = [0, 0], sizes = [4, 16], strides = [1, 1]} : vector<4x512xf32> to vector<4x16xf32>
    %10 = tpu.concatenate %8, %9 in 1 : vector<4x496xf32>, vector<4x16xf32> -> vector<4x512xf32>
    %11 = vector.extract_strided_slice %0 {offsets = [0, 32], sizes = [4, 480], strides = [1, 1]} : vector<4x512xf32> to vector<4x480xf32>
    %12 = vector.extract_strided_slice %0 {offsets = [0, 0], sizes = [4, 32], strides = [1, 1]} : vector<4x512xf32> to vector<4x32xf32>
    %13 = tpu.concatenate %11, %12 in 1 : vector<4x480xf32>, vector<4x32xf32> -> vector<4x512xf32>
    %14 = vector.extract_strided_slice %4 {offsets = [0, 510], sizes = [4, 2], strides = [1, 1]} : vector<4x512xf32> to vector<4x2xf32>
    %15 = vector.extract_strided_slice %4 {offsets = [0, 0], sizes = [4, 510], strides = [1, 1]} : vector<4x512xf32> to vector<4x510xf32>
    %16 = tpu.concatenate %14, %15 in 1 : vector<4x2xf32>, vector<4x510xf32> -> vector<4x512xf32>
    %17 = vector.extract_strided_slice %1 {offsets = [0, 0], sizes = [1, 512], strides = [1, 1]} : vector<25x512xf32> to vector<1x512xf32>
    %18 = vector.broadcast %17 : vector<1x512xf32> to vector<4x512xf32>
    %19 = arith.mulf %16, %18 : vector<4x512xf32>
    %20 = vector.extract_strided_slice %4 {offsets = [0, 511], sizes = [4, 1], strides = [1, 1]} : vector<4x512xf32> to vector<4x1xf32>
    %21 = vector.extract_strided_slice %4 {offsets = [0, 0], sizes = [4, 511], strides = [1, 1]} : vector<4x512xf32> to vector<4x511xf32>
    %22 = tpu.concatenate %20, %21 in 1 : vector<4x1xf32>, vector<4x511xf32> -> vector<4x512xf32>
    %23 = vector.extract_strided_slice %1 {offsets = [1, 0], sizes = [1, 512], strides = [1, 1]} : vector<25x512xf32> to vector<1x512xf32>
    %24 = vector.broadcast %23 : vector<1x512xf32> to vector<4x512xf32>
    %25 = arith.mulf %22, %24 : vector<4x512xf32>
    %26 = vector.extract_strided_slice %1 {offsets = [2, 0], sizes = [1, 512], strides = [1, 1]} : vector<25x512xf32> to vector<1x512xf32>
    %27 = vector.broadcast %26 : vector<1x512xf32> to vector<4x512xf32>
    %28 = arith.mulf %4, %27 : vector<4x512xf32>
    %29 = vector.extract_strided_slice %4 {offsets = [0, 1], sizes = [4, 511], strides = [1, 1]} : vector<4x512xf32> to vector<4x511xf32>
    %30 = vector.extract_strided_slice %4 {offsets = [0, 0], sizes = [4, 1], strides = [1, 1]} : vector<4x512xf32> to vector<4x1xf32>
    %31 = tpu.concatenate %29, %30 in 1 : vector<4x511xf32>, vector<4x1xf32> -> vector<4x512xf32>
    %32 = vector.extract_strided_slice %1 {offsets = [3, 0], sizes = [1, 512], strides = [1, 1]} : vector<25x512xf32> to vector<1x512xf32>
    %33 = vector.broadcast %32 : vector<1x512xf32> to vector<4x512xf32>
    %34 = arith.mulf %31, %33 : vector<4x512xf32>
    %35 = tpu.concatenate %19, %25, %28, %34 in 0 : vector<4x512xf32>, vector<4x512xf32>, vector<4x512xf32>, vector<4x512xf32> -> vector<16x512xf32>
    %36 = arith.truncf %35 : vector<16x512xf32> to vector<16x512xbf16>
    %c0_3 = arith.constant 0 : index
    %c0_4 = arith.constant 0 : index
    %37 = vector.load %arg11[%c0_3, %c0_4] : memref<128x512xbf16, #tpu.memory_space<vmem>>, vector<16x512xbf16>
    tpu.vector_store %arg11[%c0_3, %c0_4], %36 {strides = array<i32>} : memref<128x512xbf16, #tpu.memory_space<vmem>>, vector<16x512xbf16>,
    %38 = vector.extract_strided_slice %4 {offsets = [0, 2], sizes = [4, 510], strides = [1, 1]} : vector<4x512xf32> to vector<4x510xf32>
    %39 = vector.extract_strided_slice %4 {offsets = [0, 0], sizes = [4, 2], strides = [1, 1]} : vector<4x512xf32> to vector<4x2xf32>
    %40 = tpu.concatenate %38, %39 in 1 : vector<4x510xf32>, vector<4x2xf32> -> vector<4x512xf32>
    %41 = vector.extract_strided_slice %1 {offsets = [4, 0], sizes = [1, 512], strides = [1, 1]} : vector<25x512xf32> to vector<1x512xf32>
    %42 = vector.broadcast %41 : vector<1x512xf32> to vector<4x512xf32>
    %43 = arith.mulf %40, %42 : vector<4x512xf32>
    %44 = vector.extract_strided_slice %7 {offsets = [0, 510], sizes = [4, 2], strides = [1, 1]} : vector<4x512xf32> to vector<4x2xf32>
    %45 = vector.extract_strided_slice %7 {offsets = [0, 0], sizes = [4, 510], strides = [1, 1]} : vector<4x512xf32> to vector<4x510xf32>
    %46 = tpu.concatenate %44, %45 in 1 : vector<4x2xf32>, vector<4x510xf32> -> vector<4x512xf32>
    %47 = vector.extract_strided_slice %1 {offsets = [5, 0], sizes = [1, 512], strides = [1, 1]} : vector<25x512xf32> to vector<1x512xf32>
    %48 = vector.broadcast %47 : vector<1x512xf32> to vector<4x512xf32>
    %49 = arith.mulf %46, %48 : vector<4x512xf32>
    %50 = vector.extract_strided_slice %7 {offsets = [0, 511], sizes = [4, 1], strides = [1, 1]} : vector<4x512xf32> to vector<4x1xf32>
    %51 = vector.extract_strided_slice %7 {offsets = [0, 0], sizes = [4, 511], strides = [1, 1]} : vector<4x512xf32> to vector<4x511xf32>
    %52 = tpu.concatenate %50, %51 in 1 : vector<4x1xf32>, vector<4x511xf32> -> vector<4x512xf32>
    %53 = vector.extract_strided_slice %1 {offsets = [6, 0], sizes = [1, 512], strides = [1, 1]} : vector<25x512xf32> to vector<1x512xf32>
    %54 = vector.broadcast %53 : vector<1x512xf32> to vector<4x512xf32>
    %55 = arith.mulf %52, %54 : vector<4x512xf32>
    %56 = vector.extract_strided_slice %1 {offsets = [7, 0], sizes = [1, 512], strides = [1, 1]} : vector<25x512xf32> to vector<1x512xf32>
    %57 = vector.broadcast %56 : vector<1x512xf32> to vector<4x512xf32>
    %58 = arith.mulf %7, %57 : vector<4x512xf32>
    %59 = tpu.concatenate %43, %49, %55, %58 in 0 : vector<4x512xf32>, vector<4x512xf32>, vector<4x512xf32>, vector<4x512xf32> -> vector<16x512xf32>
    %60 = arith.truncf %59 : vector<16x512xf32> to vector<16x512xbf16>
    %c16 = arith.constant 16 : index
    %c0_5 = arith.constant 0 : index
    %61 = vector.load %arg11[%c16, %c0_5] : memref<128x512xbf16, #tpu.memory_space<vmem>>, vector<16x512xbf16>
    tpu.vector_store %arg11[%c16, %c0_5], %60 {strides = array<i32>} : memref<128x512xbf16, #tpu.memory_space<vmem>>, vector<16x512xbf16>,
    %62 = vector.extract_strided_slice %7 {offsets = [0, 1], sizes = [4, 511], strides = [1, 1]} : vector<4x512xf32> to vector<4x511xf32>
    %63 = vector.extract_strided_slice %7 {offsets = [0, 0], sizes = [4, 1], strides = [1, 1]} : vector<4x512xf32> to vector<4x1xf32>
    %64 = tpu.concatenate %62, %63 in 1 : vector<4x511xf32>, vector<4x1xf32> -> vector<4x512xf32>
    %65 = vector.extract_strided_slice %1 {offsets = [8, 0], sizes = [1, 512], strides = [1, 1]} : vector<25x512xf32> to vector<1x512xf32>
    %66 = vector.broadcast %65 : vector<1x512xf32> to vector<4x512xf32>
    %67 = arith.mulf %64, %66 : vector<4x512xf32>
    %68 = vector.extract_strided_slice %7 {offsets = [0, 2], sizes = [4, 510], strides = [1, 1]} : vector<4x512xf32> to vector<4x510xf32>
    %69 = vector.extract_strided_slice %7 {offsets = [0, 0], sizes = [4, 2], strides = [1, 1]} : vector<4x512xf32> to vector<4x2xf32>
    %70 = tpu.concatenate %68, %69 in 1 : vector<4x510xf32>, vector<4x2xf32> -> vector<4x512xf32>
    %71 = vector.extract_strided_slice %1 {offsets = [9, 0], sizes = [1, 512], strides = [1, 1]} : vector<25x512xf32> to vector<1x512xf32>
    %72 = vector.broadcast %71 : vector<1x512xf32> to vector<4x512xf32>
    %73 = arith.mulf %70, %72 : vector<4x512xf32>
    %74 = vector.extract_strided_slice %0 {offsets = [0, 510], sizes = [4, 2], strides = [1, 1]} : vector<4x512xf32> to vector<4x2xf32>
    %75 = vector.extract_strided_slice %0 {offsets = [0, 0], sizes = [4, 510], strides = [1, 1]} : vector<4x512xf32> to vector<4x510xf32>
    %76 = tpu.concatenate %74, %75 in 1 : vector<4x2xf32>, vector<4x510xf32> -> vector<4x512xf32>
    %77 = vector.extract_strided_slice %1 {offsets = [10, 0], sizes = [1, 512], strides = [1, 1]} : vector<25x512xf32> to vector<1x512xf32>
    %78 = vector.broadcast %77 : vector<1x512xf32> to vector<4x512xf32>
    %79 = arith.mulf %76, %78 : vector<4x512xf32>
    %80 = vector.extract_strided_slice %0 {offsets = [0, 511], sizes = [4, 1], strides = [1, 1]} : vector<4x512xf32> to vector<4x1xf32>
    %81 = vector.extract_strided_slice %0 {offsets = [0, 0], sizes = [4, 511], strides = [1, 1]} : vector<4x512xf32> to vector<4x511xf32>
    %82 = tpu.concatenate %80, %81 in 1 : vector<4x1xf32>, vector<4x511xf32> -> vector<4x512xf32>
    %83 = vector.extract_strided_slice %1 {offsets = [11, 0], sizes = [1, 512], strides = [1, 1]} : vector<25x512xf32> to vector<1x512xf32>
    %84 = vector.broadcast %83 : vector<1x512xf32> to vector<4x512xf32>
    %85 = arith.mulf %82, %84 : vector<4x512xf32>
    %86 = tpu.concatenate %67, %73, %79, %85 in 0 : vector<4x512xf32>, vector<4x512xf32>, vector<4x512xf32>, vector<4x512xf32> -> vector<16x512xf32>
    %87 = arith.truncf %86 : vector<16x512xf32> to vector<16x512xbf16>
    %c32 = arith.constant 32 : index
    %c0_6 = arith.constant 0 : index
    %88 = vector.load %arg11[%c32, %c0_6] : memref<128x512xbf16, #tpu.memory_space<vmem>>, vector<16x512xbf16>
    tpu.vector_store %arg11[%c32, %c0_6], %87 {strides = array<i32>} : memref<128x512xbf16, #tpu.memory_space<vmem>>, vector<16x512xbf16>,
    %89 = vector.extract_strided_slice %1 {offsets = [12, 0], sizes = [1, 512], strides = [1, 1]} : vector<25x512xf32> to vector<1x512xf32>
    %90 = vector.broadcast %89 : vector<1x512xf32> to vector<4x512xf32>
    %91 = arith.mulf %0, %90 : vector<4x512xf32>
    %92 = vector.extract_strided_slice %0 {offsets = [0, 1], sizes = [4, 511], strides = [1, 1]} : vector<4x512xf32> to vector<4x511xf32>
    %93 = vector.extract_strided_slice %0 {offsets = [0, 0], sizes = [4, 1], strides = [1, 1]} : vector<4x512xf32> to vector<4x1xf32>
    %94 = tpu.concatenate %92, %93 in 1 : vector<4x511xf32>, vector<4x1xf32> -> vector<4x512xf32>
    %95 = vector.extract_strided_slice %1 {offsets = [13, 0], sizes = [1, 512], strides = [1, 1]} : vector<25x512xf32> to vector<1x512xf32>
    %96 = vector.broadcast %95 : vector<1x512xf32> to vector<4x512xf32>
    %97 = arith.mulf %94, %96 : vector<4x512xf32>
    %98 = vector.extract_strided_slice %0 {offsets = [0, 2], sizes = [4, 510], strides = [1, 1]} : vector<4x512xf32> to vector<4x510xf32>
    %99 = vector.extract_strided_slice %0 {offsets = [0, 0], sizes = [4, 2], strides = [1, 1]} : vector<4x512xf32> to vector<4x2xf32>
    %100 = tpu.concatenate %98, %99 in 1 : vector<4x510xf32>, vector<4x2xf32> -> vector<4x512xf32>
    %101 = vector.extract_strided_slice %1 {offsets = [14, 0], sizes = [1, 512], strides = [1, 1]} : vector<25x512xf32> to vector<1x512xf32>
    %102 = vector.broadcast %101 : vector<1x512xf32> to vector<4x512xf32>
    %103 = arith.mulf %100, %102 : vector<4x512xf32>
    %104 = vector.extract_strided_slice %10 {offsets = [0, 510], sizes = [4, 2], strides = [1, 1]} : vector<4x512xf32> to vector<4x2xf32>
    %105 = vector.extract_strided_slice %10 {offsets = [0, 0], sizes = [4, 510], strides = [1, 1]} : vector<4x512xf32> to vector<4x510xf32>
    %106 = tpu.concatenate %104, %105 in 1 : vector<4x2xf32>, vector<4x510xf32> -> vector<4x512xf32>
    %107 = vector.extract_strided_slice %1 {offsets = [15, 0], sizes = [1, 512], strides = [1, 1]} : vector<25x512xf32> to vector<1x512xf32>
    %108 = vector.broadcast %107 : vector<1x512xf32> to vector<4x512xf32>
    %109 = arith.mulf %106, %108 : vector<4x512xf32>
    %110 = tpu.concatenate %91, %97, %103, %109 in 0 : vector<4x512xf32>, vector<4x512xf32>, vector<4x512xf32>, vector<4x512xf32> -> vector<16x512xf32>
    %111 = arith.truncf %110 : vector<16x512xf32> to vector<16x512xbf16>
    %c48 = arith.constant 48 : index
    %c0_7 = arith.constant 0 : index
    %112 = vector.load %arg11[%c48, %c0_7] : memref<128x512xbf16, #tpu.memory_space<vmem>>, vector<16x512xbf16>
    tpu.vector_store %arg11[%c48, %c0_7], %111 {strides = array<i32>} : memref<128x512xbf16, #tpu.memory_space<vmem>>, vector<16x512xbf16>,
    %113 = vector.extract_strided_slice %10 {offsets = [0, 511], sizes = [4, 1], strides = [1, 1]} : vector<4x512xf32> to vector<4x1xf32>
    %114 = vector.extract_strided_slice %10 {offsets = [0, 0], sizes = [4, 511], strides = [1, 1]} : vector<4x512xf32> to vector<4x511xf32>
    %115 = tpu.concatenate %113, %114 in 1 : vector<4x1xf32>, vector<4x511xf32> -> vector<4x512xf32>
    %116 = vector.extract_strided_slice %1 {offsets = [16, 0], sizes = [1, 512], strides = [1, 1]} : vector<25x512xf32> to vector<1x512xf32>
    %117 = vector.broadcast %116 : vector<1x512xf32> to vector<4x512xf32>
    %118 = arith.mulf %115, %117 : vector<4x512xf32>
    %119 = vector.extract_strided_slice %1 {offsets = [17, 0], sizes = [1, 512], strides = [1, 1]} : vector<25x512xf32> to vector<1x512xf32>
    %120 = vector.broadcast %119 : vector<1x512xf32> to vector<4x512xf32>
    %121 = arith.mulf %10, %120 : vector<4x512xf32>
    %122 = vector.extract_strided_slice %10 {offsets = [0, 1], sizes = [4, 511], strides = [1, 1]} : vector<4x512xf32> to vector<4x511xf32>
    %123 = vector.extract_strided_slice %10 {offsets = [0, 0], sizes = [4, 1], strides = [1, 1]} : vector<4x512xf32> to vector<4x1xf32>
    %124 = tpu.concatenate %122, %123 in 1 : vector<4x511xf32>, vector<4x1xf32> -> vector<4x512xf32>
    %125 = vector.extract_strided_slice %1 {offsets = [18, 0], sizes = [1, 512], strides = [1, 1]} : vector<25x512xf32> to vector<1x512xf32>
    %126 = vector.broadcast %125 : vector<1x512xf32> to vector<4x512xf32>
    %127 = arith.mulf %124, %126 : vector<4x512xf32>
    %128 = vector.extract_strided_slice %10 {offsets = [0, 2], sizes = [4, 510], strides = [1, 1]} : vector<4x512xf32> to vector<4x510xf32>
    %129 = vector.extract_strided_slice %10 {offsets = [0, 0], sizes = [4, 2], strides = [1, 1]} : vector<4x512xf32> to vector<4x2xf32>
    %130 = tpu.concatenate %128, %129 in 1 : vector<4x510xf32>, vector<4x2xf32> -> vector<4x512xf32>
    %131 = vector.extract_strided_slice %1 {offsets = [19, 0], sizes = [1, 512], strides = [1, 1]} : vector<25x512xf32> to vector<1x512xf32>
    %132 = vector.broadcast %131 : vector<1x512xf32> to vector<4x512xf32>
    %133 = arith.mulf %130, %132 : vector<4x512xf32>
    %134 = tpu.concatenate %118, %121, %127, %133 in 0 : vector<4x512xf32>, vector<4x512xf32>, vector<4x512xf32>, vector<4x512xf32> -> vector<16x512xf32>
    %135 = arith.truncf %134 : vector<16x512xf32> to vector<16x512xbf16>
    %c64 = arith.constant 64 : index
    %c0_8 = arith.constant 0 : index
    %136 = vector.load %arg11[%c64, %c0_8] : memref<128x512xbf16, #tpu.memory_space<vmem>>, vector<16x512xbf16>
    tpu.vector_store %arg11[%c64, %c0_8], %135 {strides = array<i32>} : memref<128x512xbf16, #tpu.memory_space<vmem>>, vector<16x512xbf16>,
    %137 = vector.extract_strided_slice %13 {offsets = [0, 510], sizes = [4, 2], strides = [1, 1]} : vector<4x512xf32> to vector<4x2xf32>
    %138 = vector.extract_strided_slice %13 {offsets = [0, 0], sizes = [4, 510], strides = [1, 1]} : vector<4x512xf32> to vector<4x510xf32>
    %139 = tpu.concatenate %137, %138 in 1 : vector<4x2xf32>, vector<4x510xf32> -> vector<4x512xf32>
    %140 = vector.extract_strided_slice %1 {offsets = [20, 0], sizes = [1, 512], strides = [1, 1]} : vector<25x512xf32> to vector<1x512xf32>
    %141 = vector.broadcast %140 : vector<1x512xf32> to vector<4x512xf32>
    %142 = arith.mulf %139, %141 : vector<4x512xf32>
    %143 = vector.extract_strided_slice %13 {offsets = [0, 511], sizes = [4, 1], strides = [1, 1]} : vector<4x512xf32> to vector<4x1xf32>
    %144 = vector.extract_strided_slice %13 {offsets = [0, 0], sizes = [4, 511], strides = [1, 1]} : vector<4x512xf32> to vector<4x511xf32>
    %145 = tpu.concatenate %143, %144 in 1 : vector<4x1xf32>, vector<4x511xf32> -> vector<4x512xf32>
    %146 = vector.extract_strided_slice %1 {offsets = [21, 0], sizes = [1, 512], strides = [1, 1]} : vector<25x512xf32> to vector<1x512xf32>
    %147 = vector.broadcast %146 : vector<1x512xf32> to vector<4x512xf32>
    %148 = arith.mulf %145, %147 : vector<4x512xf32>
    %149 = vector.extract_strided_slice %1 {offsets = [22, 0], sizes = [1, 512], strides = [1, 1]} : vector<25x512xf32> to vector<1x512xf32>
    %150 = vector.broadcast %149 : vector<1x512xf32> to vector<4x512xf32>
    %151 = arith.mulf %13, %150 : vector<4x512xf32>
    %152 = vector.extract_strided_slice %13 {offsets = [0, 1], sizes = [4, 511], strides = [1, 1]} : vector<4x512xf32> to vector<4x511xf32>
    %153 = vector.extract_strided_slice %13 {offsets = [0, 0], sizes = [4, 1], strides = [1, 1]} : vector<4x512xf32> to vector<4x1xf32>
    %154 = tpu.concatenate %152, %153 in 1 : vector<4x511xf32>, vector<4x1xf32> -> vector<4x512xf32>
    %155 = vector.extract_strided_slice %1 {offsets = [23, 0], sizes = [1, 512], strides = [1, 1]} : vector<25x512xf32> to vector<1x512xf32>
    %156 = vector.broadcast %155 : vector<1x512xf32> to vector<4x512xf32>
    %157 = arith.mulf %154, %156 : vector<4x512xf32>
    %158 = tpu.concatenate %142, %148, %151, %157 in 0 : vector<4x512xf32>, vector<4x512xf32>, vector<4x512xf32>, vector<4x512xf32> -> vector<16x512xf32>
    %159 = arith.truncf %158 : vector<16x512xf32> to vector<16x512xbf16>
    %c80 = arith.constant 80 : index
    %c0_9 = arith.constant 0 : index
    %160 = vector.load %arg11[%c80, %c0_9] : memref<128x512xbf16, #tpu.memory_space<vmem>>, vector<16x512xbf16>
    tpu.vector_store %arg11[%c80, %c0_9], %159 {strides = array<i32>} : memref<128x512xbf16, #tpu.memory_space<vmem>>, vector<16x512xbf16>,
    %161 = vector.extract_strided_slice %13 {offsets = [0, 2], sizes = [4, 510], strides = [1, 1]} : vector<4x512xf32> to vector<4x510xf32>
    %162 = vector.extract_strided_slice %13 {offsets = [0, 0], sizes = [4, 2], strides = [1, 1]} : vector<4x512xf32> to vector<4x2xf32>
    %163 = tpu.concatenate %161, %162 in 1 : vector<4x510xf32>, vector<4x2xf32> -> vector<4x512xf32>
    %164 = vector.extract_strided_slice %1 {offsets = [24, 0], sizes = [1, 512], strides = [1, 1]} : vector<25x512xf32> to vector<1x512xf32>
    %165 = vector.broadcast %164 : vector<1x512xf32> to vector<4x512xf32>
    %166 = arith.mulf %163, %165 : vector<4x512xf32>
    %cst = arith.constant 0.000000e+00 : f32
    %167 = vector.broadcast %cst : f32 to vector<28x512xf32>
    %168 = tpu.concatenate %166, %167 in 0 : vector<4x512xf32>, vector<28x512xf32> -> vector<32x512xf32>
    %169 = arith.truncf %168 : vector<32x512xf32> to vector<32x512xbf16>
    %c96 = arith.constant 96 : index
    %c0_10 = arith.constant 0 : index
    %170 = vector.load %arg11[%c96, %c0_10] : memref<128x512xbf16, #tpu.memory_space<vmem>>, vector<32x512xbf16>
    tpu.vector_store %arg11[%c96, %c0_10], %169 {strides = array<i32>} : memref<128x512xbf16, #tpu.memory_space<vmem>>, vector<32x512xbf16>,
    %c0_11 = arith.constant 0 : index
    %c0_12 = arith.constant 0 : index
    %171 = vector.load %arg2[%c0_11, %c0_12] : memref<24x128xbf16, #tpu.memory_space<vmem>>, vector<24x128xbf16>
    %c0_13 = arith.constant 0 : index
    %c0_14 = arith.constant 0 : index
    %172 = vector.load %arg11[%c0_13, %c0_14] : memref<128x512xbf16, #tpu.memory_space<vmem>>, vector<128x512xbf16>
    %cst_15 = arith.constant dense<0.000000e+00> : vector<24x512xf32>
    %173 = tpu.matmul %171, %172, %cst_15 {dimension_numbers = #tpu.dot_dimension_numbers<[1], [0], [0], [1], [0, 0, 1, 1], [], []>} : vector<24x128xbf16>, vector<128x512xbf16>, vector<24x512xf32> -> vector<24x512xf32>
    %c0_16 = arith.constant 0 : index
    %c0_17 = arith.constant 0 : index
    %174 = vector.load %arg3[%c0_16, %c0_17] : memref<24x1xf32, #tpu.memory_space<vmem>>, vector<24x1xf32>
    %175 = vector.broadcast %174 : vector<24x1xf32> to vector<24x512xf32>
    %176 = arith.addf %173, %175 : vector<24x512xf32>
    %cst_18 = arith.constant 0.000000e+00 : f32
    %177 = vector.broadcast %cst_18 : f32 to vector<24x512xf32>
    %178 = arith.maximumf %176, %177 : vector<24x512xf32>
    %c0_19 = arith.constant 0 : index
    %c0_20 = arith.constant 0 : index
    %179 = vector.load %arg10[%c0_19, %c0_20] : memref<32x512xf32, #tpu.memory_space<vmem>>, vector<24x512xf32>
    tpu.vector_store %arg10[%c0_19, %c0_20], %178 {strides = array<i32>} : memref<32x512xf32, #tpu.memory_space<vmem>>, vector<24x512xf32>,
    %180 = vector.extract_strided_slice %0 {offsets = [0, 1], sizes = [4, 511], strides = [1, 1]} : vector<4x512xf32> to vector<4x511xf32>
    %181 = vector.extract_strided_slice %0 {offsets = [0, 0], sizes = [4, 1], strides = [1, 1]} : vector<4x512xf32> to vector<4x1xf32>
    %182 = tpu.concatenate %180, %181 in 1 : vector<4x511xf32>, vector<4x1xf32> -> vector<4x512xf32>
    %183 = arith.maximumf %0, %182 : vector<4x512xf32>
    %184 = vector.extract_strided_slice %183 {offsets = [0, 16], sizes = [4, 496], strides = [1, 1]} : vector<4x512xf32> to vector<4x496xf32>
    %185 = vector.extract_strided_slice %183 {offsets = [0, 0], sizes = [4, 16], strides = [1, 1]} : vector<4x512xf32> to vector<4x16xf32>
    %186 = tpu.concatenate %184, %185 in 1 : vector<4x496xf32>, vector<4x16xf32> -> vector<4x512xf32>
    %187 = arith.maximumf %183, %186 : vector<4x512xf32>
    %188 = arith.truncf %187 : vector<4x512xf32> to vector<4x512xbf16>
    %c0_21 = arith.constant 0 : index
    %c0_22 = arith.constant 0 : index
    %189 = vector.load %arg5[%c0_21, %c0_22] : memref<512x128xbf16, #tpu.memory_space<vmem>>, vector<512x128xbf16>
    %cst_23 = arith.constant dense<0.000000e+00> : vector<4x128xf32>
    %190 = tpu.matmul %188, %189, %cst_23 {dimension_numbers = #tpu.dot_dimension_numbers<[1], [0], [0], [1], [0, 0, 1, 1], [], []>} : vector<4x512xbf16>, vector<512x128xbf16>, vector<4x128xf32> -> vector<4x128xf32>
    %c0_24 = arith.constant 0 : index
    %c0_25 = arith.constant 0 : index
    %191 = vector.load %arg6[%c0_24, %c0_25] : memref<512x128xf32, #tpu.memory_space<vmem>>, vector<512x128xf32>
    %cst_26 = arith.constant dense<0.000000e+00> : vector<4x128xf32>
    %192 = tpu.matmul %0, %191, %cst_26 {dimension_numbers = #tpu.dot_dimension_numbers<[1], [0], [0], [1], [0, 0, 1, 1], [], []>} : vector<4x512xf32>, vector<512x128xf32>, vector<4x128xf32> -> vector<4x128xf32>
    %193 = tpu.concatenate %190, %192 in 0 : vector<4x128xf32>, vector<4x128xf32> -> vector<8x128xf32>
    %c0_27 = arith.constant 0 : index
    %c0_28 = arith.constant 0 : index
    %194 = vector.load %arg7[%c0_27, %c0_28] : memref<8x8xf32, #tpu.memory_space<vmem>>, vector<8x8xf32>
    %cst_29 = arith.constant dense<0.000000e+00> : vector<8x128xf32>
    %195 = tpu.matmul %194, %193, %cst_29 {dimension_numbers = #tpu.dot_dimension_numbers<[1], [0], [0], [1], [0, 0, 1, 1], [], []>} : vector<8x8xf32>, vector<8x128xf32>, vector<8x128xf32> -> vector<8x128xf32>
    %c0_30 = arith.constant 0 : index
    %c0_31 = arith.constant 0 : index
    %196 = vector.load %arg8[%c0_30, %c0_31] : memref<8x1xf32, #tpu.memory_space<vmem>>, vector<8x1xf32>
    %197 = vector.broadcast %196 : vector<8x1xf32> to vector<8x128xf32>
    %198 = arith.addf %195, %197 : vector<8x128xf32>
    %cst_32 = arith.constant 0.000000e+00 : f32
    %199 = vector.broadcast %cst_32 : f32 to vector<8x128xf32>
    %200 = arith.maximumf %198, %199 : vector<8x128xf32>
    %201 = arith.truncf %200 : vector<8x128xf32> to vector<8x128xbf16>
    %c0_33 = arith.constant 0 : index
    %c0_34 = arith.constant 0 : index
    %202 = vector.load %arg9[%c0_33, %c0_34] : memref<128x512xbf16, #tpu.memory_space<vmem>>, vector<128x512xbf16>
    %cst_35 = arith.constant dense<0.000000e+00> : vector<8x512xf32>
    %203 = tpu.matmul %201, %202, %cst_35 {dimension_numbers = #tpu.dot_dimension_numbers<[1], [0], [0], [1], [0, 0, 1, 1], [], []>} : vector<8x128xbf16>, vector<128x512xbf16>, vector<8x512xf32> -> vector<8x512xf32>
    %c24 = arith.constant 24 : index
    %c0_36 = arith.constant 0 : index
    %204 = vector.load %arg10[%c24, %c0_36] : memref<32x512xf32, #tpu.memory_space<vmem>>, vector<8x512xf32>
    tpu.vector_store %arg10[%c24, %c0_36], %203 {strides = array<i32>} : memref<32x512xf32, #tpu.memory_space<vmem>>, vector<8x512xf32>,
    return
  }
  func.func @transform_0(%arg0: i32) -> (i32, i32) {
    %c0_i32 = arith.constant 0 : i32
    %c0_i32_0 = arith.constant 0 : i32
    return %c0_i32, %arg0 : i32, i32
  }
  func.func @transform_1(%arg0: i32) -> (i32, i32) {
    %c0_i32 = arith.constant 0 : i32
    %c0_i32_0 = arith.constant 0 : i32
    %c0_i32_1 = arith.constant 0 : i32
    return %c0_i32, %c0_i32_0 : i32, i32
  }
  func.func @transform_2(%arg0: i32) -> (i32, i32) {
    %c0_i32 = arith.constant 0 : i32
    %c0_i32_0 = arith.constant 0 : i32
    %c0_i32_1 = arith.constant 0 : i32
    return %c0_i32, %c0_i32_0 : i32, i32
  }
  func.func @transform_3(%arg0: i32) -> (i32, i32) {
    %c0_i32 = arith.constant 0 : i32
    %c0_i32_0 = arith.constant 0 : i32
    %c0_i32_1 = arith.constant 0 : i32
    return %c0_i32, %c0_i32_0 : i32, i32
  }
  func.func @transform_4(%arg0: i32) -> (i32, i32) {
    %c0_i32 = arith.constant 0 : i32
    %c0_i32_0 = arith.constant 0 : i32
    %c0_i32_1 = arith.constant 0 : i32
    return %c0_i32, %c0_i32_0 : i32, i32
  }
  func.func @transform_5(%arg0: i32) -> (i32, i32) {
    %c0_i32 = arith.constant 0 : i32
    %c0_i32_0 = arith.constant 0 : i32
    %c0_i32_1 = arith.constant 0 : i32
    return %c0_i32, %c0_i32_0 : i32, i32
  }
  func.func @transform_6(%arg0: i32) -> (i32, i32) {
    %c0_i32 = arith.constant 0 : i32
    %c0_i32_0 = arith.constant 0 : i32
    %c0_i32_1 = arith.constant 0 : i32
    return %c0_i32, %c0_i32_0 : i32, i32
  }
  func.func @transform_7(%arg0: i32) -> (i32, i32) {
    %c0_i32 = arith.constant 0 : i32
    %c0_i32_0 = arith.constant 0 : i32
    %c0_i32_1 = arith.constant 0 : i32
    return %c0_i32, %c0_i32_0 : i32, i32
  }
  func.func @transform_8(%arg0: i32) -> (i32, i32) {
    %c0_i32 = arith.constant 0 : i32
    %c0_i32_0 = arith.constant 0 : i32
    %c0_i32_1 = arith.constant 0 : i32
    return %c0_i32, %c0_i32_0 : i32, i32
  }
  func.func @transform_9(%arg0: i32) -> (i32, i32) {
    %c0_i32 = arith.constant 0 : i32
    %c0_i32_0 = arith.constant 0 : i32
    return %c0_i32, %arg0 : i32, i32
  }
}

</mosaic_0001>

<llo_original>
// kernel: tpu_custom_call.1
$region0: #{tpu_custom_call.1}
  #allocation0 [shape = 'u32[]', space=smem, size = 0x4, offset = 0x4, fixed_abs, tag = 'smem constant byte address 0x4 - core index']
  #allocation1 [shape = 'u32[144,128]{1,0:T(1,128)}', space=vmem, size = 0x12000, scoped, tag = 'internal scratch']
  #allocation2 [shape = 'bf16[128,512]{1,0:T(16,128)(2,1)}', space=vmem, size = 0x20000, scoped, tag = 'scratch operand']
  %s0 = inlined_call_operand.vmem [shape: f32[4,512], index: 0, kind: input, shape index: {}]
  %s1 = inlined_call_operand.vmem [shape: bf16[24,128], index: 1, kind: input, shape index: {}]
  %s2 = inlined_call_operand.vmem [shape: f32[24,1], index: 2, kind: input, shape index: {}]
  %s3 = inlined_call_operand.hbm [shape: f32[25,512], index: 3, kind: input, shape index: {}]
  %s4 = inlined_call_operand.hbm [shape: bf16[512,128], index: 4, kind: input, shape index: {}]
  %s5 = inlined_call_operand.hbm [shape: f32[512,128], index: 5, kind: input, shape index: {}]
  %s6 = inlined_call_operand.vmem [shape: f32[8,8], index: 6, kind: input, shape index: {}]
  %s7 = inlined_call_operand.vmem [shape: f32[8,1], index: 7, kind: input, shape index: {}]
  %s8 = inlined_call_operand.hbm [shape: bf16[128,512], index: 8, kind: input, shape index: {}]
  %s9 = inlined_call_operand.hbm [shape: f32[32,512], index: 9, kind: output, shape index: {}]
  %s10 = sld [smem:[#allocation0]]
  $region62: #{tpu_custom_call.1} parent=0
    _
  %s12 = ssub.s32 1, %s10
  %s13 = scalar_select 0, %s12, %s10
  $region1: #{tpu_custom_call.1} parent=0
    #allocation3 [shape = 'u8[65536]{0}', space=vmem, size = 0x10000, scoped, tag = 'input window, operand 3, single buffered']
    #allocation4 [shape = 's32[1]{0}', space=sflag, size = 0x4, scoped, tag = 'scoped memory for tpu_custom_call.1']
    #allocation5 [shape = 's32[1]{0}', space=sflag, size = 0x4, scoped, tag = 'scoped memory for tpu_custom_call.1']
    #allocation6 [shape = 'u8[131072]{0}', space=vmem, size = 0x20000, scoped, tag = 'input window, operand 4, single buffered']
    #allocation7 [shape = 's32[1]{0}', space=sflag, size = 0x4, scoped, tag = 'scoped memory for tpu_custom_call.1']
    #allocation8 [shape = 'u8[262144]{0}', space=vmem, size = 0x40000, scoped, tag = 'input window, operand 5, single buffered']
    #allocation9 [shape = 'u8[131072]{0}', space=vmem, size = 0x20000, scoped, tag = 'input window, operand 8, single buffered']
    #allocation10 [shape = 's32[1]{0}', space=sflag, size = 0x4, scoped, tag = 'scoped memory for tpu_custom_call.1']
    #allocation11 [shape = 'u8[65536]{0}', space=vmem, size = 0x10000, scoped, tag = 'output window, operand 0, single buffered']
    %14 = vsyncpa [#allocation4], 0
    %15 = vsyncpa [#allocation7], 0
    %16 = vsyncpa [#allocation10], 0
    %17 = vsyncpa [#allocation5], 0
    // Predicated region
    $region2: #{tpu_custom_call.1} parent=1 // pred_check
      _
    $region3: #{tpu_custom_call.1} parent=1 // pred_check_branch
      %19 = sbr.rel (0) target = $region5
    $region4: #{tpu_custom_call.1} parent=1 // pred_region
      _
    $region5: #{tpu_custom_call.1} parent=1 // pred_fallthru
      _
    // Predicated region
    $region6: #{tpu_custom_call.1} parent=1 // pred_check
      _
    $region7: #{tpu_custom_call.1} parent=1 // pred_check_branch
      %21 = sbr.rel (0) target = $region9
    $region8: #{tpu_custom_call.1} parent=1 // pred_region
      _
    $region9: #{tpu_custom_call.1} parent=1 // pred_fallthru
      _
    // Predicated region
    $region10: #{tpu_custom_call.1} parent=1 // pred_check
      _
    $region11: #{tpu_custom_call.1} parent=1 // pred_check_branch
      %23 = sbr.rel (0) target = $region13
    $region12: #{tpu_custom_call.1} parent=1 // pred_region
      _
    $region13: #{tpu_custom_call.1} parent=1 // pred_fallthru
      _
    // Predicated region
    $region14: #{tpu_custom_call.1} parent=1 // pred_check
      _
    $region15: #{tpu_custom_call.1} parent=1 // pred_check_branch
      %25 = sbr.rel (0) target = $region17
    $region16: #{tpu_custom_call.1} parent=1 // pred_region
      %s27 = ssub.s32 2048, 2048
      %28 = vsyncadd [#allocation4], %s27
      %s29 = sshll.u32 [#allocation3], 4
      %s30 = int_to_ptr.vmem [resolvable:$true] %s29
      %35 = dma.hbm_to_vmem [thread:$0]  %s3, 2048, %s30, [#allocation4], 512, 512, 32
    $region17: #{tpu_custom_call.1} parent=1 // pred_fallthru
      _
    // Predicated region
    $region18: #{tpu_custom_call.1} parent=1 // pred_check
      _
    $region19: #{tpu_custom_call.1} parent=1 // pred_check_branch
      %37 = sbr.rel (0) target = $region21
    $region20: #{tpu_custom_call.1} parent=1 // pred_region
      %s39 = ssub.s32 4096, 4096
      %40 = vsyncadd [#allocation7], %s39
      %s41 = sshll.u32 [#allocation6], 4
      %s42 = int_to_ptr.vmem [resolvable:$true] %s41
      %47 = dma.hbm_to_vmem [thread:$0]  %s4, 4096, %s42, [#allocation7], 64, 64, 4
    $region21: #{tpu_custom_call.1} parent=1 // pred_fallthru
      _
    // Predicated region
    $region22: #{tpu_custom_call.1} parent=1 // pred_check
      _
    $region23: #{tpu_custom_call.1} parent=1 // pred_check_branch
      %49 = sbr.rel (0) target = $region25
    $region24: #{tpu_custom_call.1} parent=1 // pred_region
      %s51 = ssub.s32 8192, 8192
      %52 = vsyncadd [#allocation7], %s51
      %s53 = sshll.u32 [#allocation8], 4
      %s54 = int_to_ptr.vmem [resolvable:$true] %s53
      %59 = dma.hbm_to_vmem [thread:$0]  %s5, 8192, %s54, [#allocation7], 128, 128, 8
    $region25: #{tpu_custom_call.1} parent=1 // pred_fallthru
      _
    // Predicated region
    $region26: #{tpu_custom_call.1} parent=1 // pred_check
      _
    $region27: #{tpu_custom_call.1} parent=1 // pred_check_branch
      %61 = sbr.rel (0) target = $region29
    $region28: #{tpu_custom_call.1} parent=1 // pred_region
      _
    $region29: #{tpu_custom_call.1} parent=1 // pred_fallthru
      _
    // Predicated region
    $region30: #{tpu_custom_call.1} parent=1 // pred_check
      _
    $region31: #{tpu_custom_call.1} parent=1 // pred_check_branch
      %63 = sbr.rel (0) target = $region33
    $region32: #{tpu_custom_call.1} parent=1 // pred_region
      _
    $region33: #{tpu_custom_call.1} parent=1 // pred_fallthru
      _
    // Predicated region
    $region34: #{tpu_custom_call.1} parent=1 // pred_check
      _
    $region35: #{tpu_custom_call.1} parent=1 // pred_check_branch
      %65 = sbr.rel (0) target = $region37
    $region36: #{tpu_custom_call.1} parent=1 // pred_region
      %s67 = ssub.s32 4096, 4096
      %68 = vsyncadd [#allocation10], %s67
      %s69 = sshll.u32 [#allocation9], 4
      %s70 = int_to_ptr.vmem [resolvable:$true] %s69
      %75 = dma.hbm_to_vmem [thread:$0]  %s8, 4096, %s70, [#allocation10], 256, 256, 16
    $region37: #{tpu_custom_call.1} parent=1 // pred_fallthru
      _
    // Predicated region
    $region38: #{tpu_custom_call.1} parent=1 // pred_check
      _
    $region39: #{tpu_custom_call.1} parent=1 // pred_check_branch
      %77 = sbr.rel (0) target = $region41
    $region40: #{tpu_custom_call.1} parent=1 // pred_region
      %78 = dma.done [#allocation4], 2048
    $region41: #{tpu_custom_call.1} parent=1 // pred_fallthru
      _
    // Predicated region
    $region42: #{tpu_custom_call.1} parent=1 // pred_check
      _
    $region43: #{tpu_custom_call.1} parent=1 // pred_check_branch
      %80 = sbr.rel (0) target = $region45
    $region44: #{tpu_custom_call.1} parent=1 // pred_region
      %81 = dma.done [#allocation7], 4096
    $region45: #{tpu_custom_call.1} parent=1 // pred_fallthru
      _
    // Predicated region
    $region46: #{tpu_custom_call.1} parent=1 // pred_check
      _
    $region47: #{tpu_custom_call.1} parent=1 // pred_check_branch
      %83 = sbr.rel (0) target = $region49
    $region48: #{tpu_custom_call.1} parent=1 // pred_region
      %84 = dma.done [#allocation7], 8192
    $region49: #{tpu_custom_call.1} parent=1 // pred_fallthru
      _
    // Predicated region
    $region50: #{tpu_custom_call.1} parent=1 // pred_check
      _
    $region51: #{tpu_custom_call.1} parent=1 // pred_check_branch
      %86 = sbr.rel (0) target = $region53
    $region52: #{tpu_custom_call.1} parent=1 // pred_region
      %87 = dma.done [#allocation10], 4096
    $region53: #{tpu_custom_call.1} parent=1 // pred_fallthru
      _
    %v89 = vld [vmem:[%s0] sm:$0xff]
    %v90 = vld [vmem:[%s0 + $0x8] sm:$0xff]
    %v91 = vld [vmem:[#allocation3] sm:$0xff]
    %v92 = vld [vmem:[#allocation3 + $0x8] sm:$0xff]
    %v93 = vld [vmem:[#allocation3 + $0x10] sm:$0xff]
    %v94 = vld [vmem:[#allocation3 + $0x18] sm:$0xff]
    %v95 = vld [vmem:[#allocation3 + $0x20] sm:$0xff]
    %v96 = vld [vmem:[#allocation3 + $0x28] sm:$0xff]
    %v97 = vld [vmem:[#allocation3 + $0x30] sm:$0xff]
    %v98 = vld [vmem:[#allocation3 + $0x38] sm:$0xff]
    %v99 = vld [vmem:[#allocation3 + $0x40] sm:$0xff]
    %v100 = vld [vmem:[#allocation3 + $0x48] sm:$0xff]
    %v101 = vld [vmem:[#allocation3 + $0x50] sm:$0xff]
    %v102 = vld [vmem:[#allocation3 + $0x58] sm:$0xff]
    %v103 = vld [vmem:[#allocation3 + $0x60] sm:$0x1]
    %v104 = vld [vmem:[#allocation3 + $0x68] sm:$0x1]
    %v105 = vld [vmem:[#allocation3 + $0x70] sm:$0x1]
    %v106 = vld [vmem:[#allocation3 + $0x78] sm:$0x1]
    %v108 = vcombine.high %v90, %v90
    %109 = vrot.lane.b32.xlu0 %v108, 32
    %v110 = vpop.permute.xlu0 %109
    %v113 = vcombine.high %v89, %v89
    %114 = vrot.lane.b32.xlu0 %v89, 32
    %v115 = vpop.permute.xlu0 %114
    %116 = vrot.lane.b32.xlu0 %v113, 32
    %v117 = vpop.permute.xlu0 %116
    %118 = vrot.lane.b32.xlu0 %v90, 32
    %v119 = vpop.permute.xlu0 %118
    %vm120 = vcmask 261120
    %v121 = vsel %vm120, %v115, %v117
    %v122 = vsel %vm120, %v117, %v119
    %v123 = vsel %vm120, %v119, %v110
    %v128 = vsel %vm120, %v110, %v115
    %129 = vrot.lane.b32.xlu0 %v108, 16
    %v130 = vpop.permute.xlu0 %129
    %132 = vrot.lane.b32.xlu0 %v89, 16
    %v133 = vpop.permute.xlu0 %132
    %134 = vrot.lane.b32.xlu0 %v113, 16
    %v135 = vpop.permute.xlu0 %134
    %136 = vrot.lane.b32.xlu0 %v90, 16
    %v137 = vpop.permute.xlu0 %136
    %vm138 = vcmask 130048
    %v139 = vsel %vm138, %v133, %v135
    %v140 = vsel %vm138, %v135, %v137
    %v141 = vsel %vm138, %v137, %v130
    %v146 = vsel %vm138, %v130, %v133
    %147 = vrot.lane.b32.xlu0 %v89, 112
    %v148 = vpop.permute.xlu0 %147
    %149 = vrot.lane.b32.xlu0 %v113, 112
    %v150 = vpop.permute.xlu0 %149
    %151 = vrot.lane.b32.xlu0 %v90, 112
    %v152 = vpop.permute.xlu0 %151
    %153 = vrot.lane.b32.xlu0 %v108, 112
    %v154 = vpop.permute.xlu0 %153
    %vm155 = vcmask 916480
    %v156 = vsel %vm155, %v148, %v150
    %v157 = vsel %vm155, %v150, %v152
    %v158 = vsel %vm155, %v152, %v154
    %v164 = vsel %vm155, %v154, %v148
    %165 = vrot.lane.b32.xlu0 %v89, 96
    %v166 = vpop.permute.xlu0 %165
    %167 = vrot.lane.b32.xlu0 %v113, 96
    %v168 = vpop.permute.xlu0 %167
    %169 = vrot.lane.b32.xlu0 %v90, 96
    %v170 = vpop.permute.xlu0 %169
    %171 = vrot.lane.b32.xlu0 %v108, 96
    %v172 = vpop.permute.xlu0 %171
    %vm173 = vcmask 785408
    %v174 = vsel %vm173, %v166, %v168
    %v175 = vsel %vm173, %v168, %v170
    %v176 = vsel %vm173, %v170, %v172
    %v182 = vsel %vm173, %v172, %v166
    %183 = vrot.lane.b32.xlu0 %v123, 2
    %v184 = vpop.permute.xlu0 %183
    %187 = vrot.lane.b32.xlu0 %v128, 2
    %v188 = vpop.permute.xlu0 %187
    %189 = vrot.lane.b32.xlu0 %v121, 2
    %v190 = vpop.permute.xlu0 %189
    %191 = vrot.lane.b32.xlu0 %v122, 2
    %v192 = vpop.permute.xlu0 %191
    %vm193 = vcmask 15360
    %v194 = vsel %vm193, %v188, %v190
    %v195 = vsel %vm193, %v190, %v192
    %v196 = vsel %vm193, %v192, %v184
    %v201 = vsel %vm193, %v184, %v188
    %v202 = vlaneseq
    %v203 = vshrl.u32 %v202, 7
    %v204 = vsub.s32 0, %v203
    %v205 = vrot.slane %v91, %v204
    %v206 = vlaneseq
    %v207 = vshrl.u32 %v206, 7
    %v208 = vsub.s32 0, %v207
    %v209 = vrot.slane %v92, %v208
    %v210 = vlaneseq
    %v211 = vshrl.u32 %v210, 7
    %v212 = vsub.s32 0, %v211
    %v213 = vrot.slane %v93, %v212
    %v214 = vlaneseq
    %v215 = vshrl.u32 %v214, 7
    %v216 = vsub.s32 0, %v215
    %v217 = vrot.slane %v94, %v216
    %v218 = vmul.f32 %v201, %v205
    %v219 = vmul.f32 %v194, %v209
    %v220 = vmul.f32 %v195, %v213
    %v221 = vmul.f32 %v196, %v217
    %222 = vrot.lane.b32.xlu0 %v123, 1
    %v223 = vpop.permute.xlu0 %222
    %225 = vrot.lane.b32.xlu0 %v128, 1
    %v226 = vpop.permute.xlu0 %225
    %227 = vrot.lane.b32.xlu0 %v121, 1
    %v228 = vpop.permute.xlu0 %227
    %229 = vrot.lane.b32.xlu0 %v122, 1
    %v230 = vpop.permute.xlu0 %229
    %vm231 = vcmask 7168
    %v232 = vsel %vm231, %v226, %v228
    %v233 = vsel %vm231, %v228, %v230
    %v234 = vsel %vm231, %v230, %v223
    %v239 = vsel %vm231, %v223, %v226
    %v240 = vlaneseq
    %v241 = vshrl.u32 %v240, 7
    %v242 = vsub.s32 1, %v241
    %v243 = vrot.slane %v91, %v242
    %v244 = vlaneseq
    %v245 = vshrl.u32 %v244, 7
    %v246 = vsub.s32 1, %v245
    %v247 = vrot.slane %v92, %v246
    %v248 = vlaneseq
    %v249 = vshrl.u32 %v248, 7
    %v250 = vsub.s32 1, %v249
    %v251 = vrot.slane %v93, %v250
    %v252 = vlaneseq
    %v253 = vshrl.u32 %v252, 7
    %v254 = vsub.s32 1, %v253
    %v255 = vrot.slane %v94, %v254
    %v256 = vmul.f32 %v239, %v243
    %v257 = vmul.f32 %v232, %v247
    %v258 = vmul.f32 %v233, %v251
    %v259 = vmul.f32 %v234, %v255
    %v260 = vlaneseq
    %v261 = vshrl.u32 %v260, 7
    %v262 = vsub.s32 2, %v261
    %v263 = vrot.slane %v91, %v262
    %v264 = vlaneseq
    %v265 = vshrl.u32 %v264, 7
    %v266 = vsub.s32 2, %v265
    %v267 = vrot.slane %v92, %v266
    %v268 = vlaneseq
    %v269 = vshrl.u32 %v268, 7
    %v270 = vsub.s32 2, %v269
    %v271 = vrot.slane %v93, %v270
    %v272 = vlaneseq
    %v273 = vshrl.u32 %v272, 7
    %v274 = vsub.s32 2, %v273
    %v275 = vrot.slane %v94, %v274
    %v276 = vmul.f32 %v128, %v263
    %v277 = vmul.f32 %v121, %v267
    %v278 = vmul.f32 %v122, %v271
    %v279 = vmul.f32 %v123, %v275
    %280 = vrot.lane.b32.xlu0 %v128, 127
    %v281 = vpop.permute.xlu0 %280
    %282 = vrot.lane.b32.xlu0 %v121, 127
    %v283 = vpop.permute.xlu0 %282
    %284 = vrot.lane.b32.xlu0 %v122, 127
    %v285 = vpop.permute.xlu0 %284
    %286 = vrot.lane.b32.xlu0 %v123, 127
    %v287 = vpop.permute.xlu0 %286
    %vm288 = vcmask 1039360
    %v289 = vsel %vm288, %v281, %v283
    %v290 = vsel %vm288, %v283, %v285
    %v291 = vsel %vm288, %v285, %v287
    %v297 = vsel %vm288, %v287, %v281
    %v298 = vlaneseq
    %v299 = vshrl.u32 %v298, 7
    %v300 = vsub.s32 3, %v299
    %v301 = vrot.slane %v91, %v300
    %v302 = vlaneseq
    %v303 = vshrl.u32 %v302, 7
    %v304 = vsub.s32 3, %v303
    %v305 = vrot.slane %v92, %v304
    %v306 = vlaneseq
    %v307 = vshrl.u32 %v306, 7
    %v308 = vsub.s32 3, %v307
    %v309 = vrot.slane %v93, %v308
    %v310 = vlaneseq
    %v311 = vshrl.u32 %v310, 7
    %v312 = vsub.s32 3, %v311
    %v313 = vrot.slane %v94, %v312
    %v314 = vmul.f32 %v289, %v301
    %v315 = vmul.f32 %v290, %v305
    %v316 = vmul.f32 %v291, %v309
    %v317 = vmul.f32 %v297, %v313
    %v322 = vrot.slane %v256, 4
    %v323 = vrot.slane %v257, 4
    %v324 = vrot.slane %v258, 4
    %v325 = vrot.slane %v259, 4
    %v334 = vrot.slane %v314, 4
    %v335 = vrot.slane %v315, 4
    %v336 = vrot.slane %v316, 4
    %v337 = vrot.slane %v317, 4
    %vm342 = vcmask 1043456
    %v343 = vsel %vm342, %v218, %v322
    %v344 = vsel %vm342, %v219, %v323
    %v345 = vsel %vm342, %v220, %v324
    %v346 = vsel %vm342, %v221, %v325
    %v347 = vsel %vm342, %v276, %v334
    %v348 = vsel %vm342, %v277, %v335
    %v349 = vsel %vm342, %v278, %v336
    %v350 = vsel %vm342, %v279, %v337
    %v351 = vpack.c.bf16 %v347, %v343
    %v352 = vpack.c.bf16 %v348, %v344
    %v353 = vpack.c.bf16 %v349, %v345
    %v354 = vpack.c.bf16 %v350, %v346
    %355 = vst [vmem:[#allocation2] sm:$0xff] %v351
    %356 = vst [vmem:[#allocation2 + $0x8] sm:$0xff] %v352
    %357 = vst [vmem:[#allocation2 + $0x10] sm:$0xff] %v353
    %358 = vst [vmem:[#allocation2 + $0x18] sm:$0xff] %v354
    %359 = vrot.lane.b32.xlu0 %v128, 126
    %v360 = vpop.permute.xlu0 %359
    %361 = vrot.lane.b32.xlu0 %v121, 126
    %v362 = vpop.permute.xlu0 %361
    %363 = vrot.lane.b32.xlu0 %v122, 126
    %v364 = vpop.permute.xlu0 %363
    %365 = vrot.lane.b32.xlu0 %v123, 126
    %v366 = vpop.permute.xlu0 %365
    %vm367 = vcmask 1031168
    %v368 = vsel %vm367, %v360, %v362
    %v369 = vsel %vm367, %v362, %v364
    %v370 = vsel %vm367, %v364, %v366
    %v376 = vsel %vm367, %v366, %v360
    %v377 = vlaneseq
    %v378 = vshrl.u32 %v377, 7
    %v379 = vsub.s32 4, %v378
    %v380 = vrot.slane %v91, %v379
    %v381 = vlaneseq
    %v382 = vshrl.u32 %v381, 7
    %v383 = vsub.s32 4, %v382
    %v384 = vrot.slane %v92, %v383
    %v385 = vlaneseq
    %v386 = vshrl.u32 %v385, 7
    %v387 = vsub.s32 4, %v386
    %v388 = vrot.slane %v93, %v387
    %v389 = vlaneseq
    %v390 = vshrl.u32 %v389, 7
    %v391 = vsub.s32 4, %v390
    %v392 = vrot.slane %v94, %v391
    %v393 = vmul.f32 %v368, %v380
    %v394 = vmul.f32 %v369, %v384
    %v395 = vmul.f32 %v370, %v388
    %v396 = vmul.f32 %v376, %v392
    %397 = vrot.lane.b32.xlu0 %v141, 2
    %v398 = vpop.permute.xlu0 %397
    %401 = vrot.lane.b32.xlu0 %v146, 2
    %v402 = vpop.permute.xlu0 %401
    %403 = vrot.lane.b32.xlu0 %v139, 2
    %v404 = vpop.permute.xlu0 %403
    %405 = vrot.lane.b32.xlu0 %v140, 2
    %v406 = vpop.permute.xlu0 %405
    %v407 = vsel %vm193, %v402, %v404
    %v408 = vsel %vm193, %v404, %v406
    %v409 = vsel %vm193, %v406, %v398
    %v414 = vsel %vm193, %v398, %v402
    %v415 = vlaneseq
    %v416 = vshrl.u32 %v415, 7
    %v417 = vsub.s32 5, %v416
    %v418 = vrot.slane %v91, %v417
    %v419 = vlaneseq
    %v420 = vshrl.u32 %v419, 7
    %v421 = vsub.s32 5, %v420
    %v422 = vrot.slane %v92, %v421
    %v423 = vlaneseq
    %v424 = vshrl.u32 %v423, 7
    %v425 = vsub.s32 5, %v424
    %v426 = vrot.slane %v93, %v425
    %v427 = vlaneseq
    %v428 = vshrl.u32 %v427, 7
    %v429 = vsub.s32 5, %v428
    %v430 = vrot.slane %v94, %v429
    %v431 = vmul.f32 %v414, %v418
    %v432 = vmul.f32 %v407, %v422
    %v433 = vmul.f32 %v408, %v426
    %v434 = vmul.f32 %v409, %v430
    %435 = vrot.lane.b32.xlu0 %v141, 1
    %v436 = vpop.permute.xlu0 %435
    %438 = vrot.lane.b32.xlu0 %v146, 1
    %v439 = vpop.permute.xlu0 %438
    %440 = vrot.lane.b32.xlu0 %v139, 1
    %v441 = vpop.permute.xlu0 %440
    %442 = vrot.lane.b32.xlu0 %v140, 1
    %v443 = vpop.permute.xlu0 %442
    %v444 = vsel %vm231, %v439, %v441
    %v445 = vsel %vm231, %v441, %v443
    %v446 = vsel %vm231, %v443, %v436
    %v451 = vsel %vm231, %v436, %v439
    %v452 = vlaneseq
    %v453 = vshrl.u32 %v452, 7
    %v454 = vsub.s32 6, %v453
    %v455 = vrot.slane %v91, %v454
    %v456 = vlaneseq
    %v457 = vshrl.u32 %v456, 7
    %v458 = vsub.s32 6, %v457
    %v459 = vrot.slane %v92, %v458
    %v460 = vlaneseq
    %v461 = vshrl.u32 %v460, 7
    %v462 = vsub.s32 6, %v461
    %v463 = vrot.slane %v93, %v462
    %v464 = vlaneseq
    %v465 = vshrl.u32 %v464, 7
    %v466 = vsub.s32 6, %v465
    %v467 = vrot.slane %v94, %v466
    %v468 = vmul.f32 %v451, %v455
    %v469 = vmul.f32 %v444, %v459
    %v470 = vmul.f32 %v445, %v463
    %v471 = vmul.f32 %v446, %v467
    %v472 = vlaneseq
    %v473 = vshrl.u32 %v472, 7
    %v474 = vsub.s32 7, %v473
    %v475 = vrot.slane %v91, %v474
    %v476 = vlaneseq
    %v477 = vshrl.u32 %v476, 7
    %v478 = vsub.s32 7, %v477
    %v479 = vrot.slane %v92, %v478
    %v480 = vlaneseq
    %v481 = vshrl.u32 %v480, 7
    %v482 = vsub.s32 7, %v481
    %v483 = vrot.slane %v93, %v482
    %v484 = vlaneseq
    %v485 = vshrl.u32 %v484, 7
    %v486 = vsub.s32 7, %v485
    %v487 = vrot.slane %v94, %v486
    %v488 = vmul.f32 %v146, %v475
    %v489 = vmul.f32 %v139, %v479
    %v490 = vmul.f32 %v140, %v483
    %v491 = vmul.f32 %v141, %v487
    %v496 = vrot.slane %v431, 4
    %v497 = vrot.slane %v432, 4
    %v498 = vrot.slane %v433, 4
    %v499 = vrot.slane %v434, 4
    %v508 = vrot.slane %v488, 4
    %v509 = vrot.slane %v489, 4
    %v510 = vrot.slane %v490, 4
    %v511 = vrot.slane %v491, 4
    %v516 = vsel %vm342, %v393, %v496
    %v517 = vsel %vm342, %v394, %v497
    %v518 = vsel %vm342, %v395, %v498
    %v519 = vsel %vm342, %v396, %v499
    %v520 = vsel %vm342, %v468, %v508
    %v521 = vsel %vm342, %v469, %v509
    %v522 = vsel %vm342, %v470, %v510
    %v523 = vsel %vm342, %v471, %v511
    %v524 = vpack.c.bf16 %v520, %v516
    %v525 = vpack.c.bf16 %v521, %v517
    %v526 = vpack.c.bf16 %v522, %v518
    %v527 = vpack.c.bf16 %v523, %v519
    %528 = vst [vmem:[#allocation2 + $0x20] sm:$0xff] %v524
    %529 = vst [vmem:[#allocation2 + $0x28] sm:$0xff] %v525
    %530 = vst [vmem:[#allocation2 + $0x30] sm:$0xff] %v526
    %531 = vst [vmem:[#allocation2 + $0x38] sm:$0xff] %v527
    %532 = vrot.lane.b32.xlu0 %v146, 127
    %v533 = vpop.permute.xlu0 %532
    %534 = vrot.lane.b32.xlu0 %v139, 127
    %v535 = vpop.permute.xlu0 %534
    %536 = vrot.lane.b32.xlu0 %v140, 127
    %v537 = vpop.permute.xlu0 %536
    %538 = vrot.lane.b32.xlu0 %v141, 127
    %v539 = vpop.permute.xlu0 %538
    %v540 = vsel %vm288, %v533, %v535
    %v541 = vsel %vm288, %v535, %v537
    %v542 = vsel %vm288, %v537, %v539
    %v548 = vsel %vm288, %v539, %v533
    %v549 = vlaneseq
    %v550 = vshrl.u32 %v549, 7
    %v551 = vsub.s32 0, %v550
    %v552 = vrot.slane %v95, %v551
    %v553 = vlaneseq
    %v554 = vshrl.u32 %v553, 7
    %v555 = vsub.s32 0, %v554
    %v556 = vrot.slane %v96, %v555
    %v557 = vlaneseq
    %v558 = vshrl.u32 %v557, 7
    %v559 = vsub.s32 0, %v558
    %v560 = vrot.slane %v97, %v559
    %v561 = vlaneseq
    %v562 = vshrl.u32 %v561, 7
    %v563 = vsub.s32 0, %v562
    %v564 = vrot.slane %v98, %v563
    %v565 = vmul.f32 %v540, %v552
    %v566 = vmul.f32 %v541, %v556
    %v567 = vmul.f32 %v542, %v560
    %v568 = vmul.f32 %v548, %v564
    %569 = vrot.lane.b32.xlu0 %v146, 126
    %v570 = vpop.permute.xlu0 %569
    %571 = vrot.lane.b32.xlu0 %v139, 126
    %v572 = vpop.permute.xlu0 %571
    %573 = vrot.lane.b32.xlu0 %v140, 126
    %v574 = vpop.permute.xlu0 %573
    %575 = vrot.lane.b32.xlu0 %v141, 126
    %v576 = vpop.permute.xlu0 %575
    %v577 = vsel %vm367, %v570, %v572
    %v578 = vsel %vm367, %v572, %v574
    %v579 = vsel %vm367, %v574, %v576
    %v585 = vsel %vm367, %v576, %v570
    %v586 = vlaneseq
    %v587 = vshrl.u32 %v586, 7
    %v588 = vsub.s32 1, %v587
    %v589 = vrot.slane %v95, %v588
    %v590 = vlaneseq
    %v591 = vshrl.u32 %v590, 7
    %v592 = vsub.s32 1, %v591
    %v593 = vrot.slane %v96, %v592
    %v594 = vlaneseq
    %v595 = vshrl.u32 %v594, 7
    %v596 = vsub.s32 1, %v595
    %v597 = vrot.slane %v97, %v596
    %v598 = vlaneseq
    %v599 = vshrl.u32 %v598, 7
    %v600 = vsub.s32 1, %v599
    %v601 = vrot.slane %v98, %v600
    %v602 = vmul.f32 %v577, %v589
    %v603 = vmul.f32 %v578, %v593
    %v604 = vmul.f32 %v579, %v597
    %v605 = vmul.f32 %v585, %v601
    %606 = vrot.lane.b32.xlu0 %v108, 2
    %v607 = vpop.permute.xlu0 %606
    %609 = vrot.lane.b32.xlu0 %v89, 2
    %v610 = vpop.permute.xlu0 %609
    %611 = vrot.lane.b32.xlu0 %v113, 2
    %v612 = vpop.permute.xlu0 %611
    %613 = vrot.lane.b32.xlu0 %v90, 2
    %v614 = vpop.permute.xlu0 %613
    %v615 = vsel %vm193, %v610, %v612
    %v616 = vsel %vm193, %v612, %v614
    %v617 = vsel %vm193, %v614, %v607
    %v622 = vsel %vm193, %v607, %v610
    %v623 = vlaneseq
    %v624 = vshrl.u32 %v623, 7
    %v625 = vsub.s32 2, %v624
    %v626 = vrot.slane %v95, %v625
    %v627 = vlaneseq
    %v628 = vshrl.u32 %v627, 7
    %v629 = vsub.s32 2, %v628
    %v630 = vrot.slane %v96, %v629
    %v631 = vlaneseq
    %v632 = vshrl.u32 %v631, 7
    %v633 = vsub.s32 2, %v632
    %v634 = vrot.slane %v97, %v633
    %v635 = vlaneseq
    %v636 = vshrl.u32 %v635, 7
    %v637 = vsub.s32 2, %v636
    %v638 = vrot.slane %v98, %v637
    %v639 = vmul.f32 %v622, %v626
    %v640 = vmul.f32 %v615, %v630
    %v641 = vmul.f32 %v616, %v634
    %v642 = vmul.f32 %v617, %v638
    %643 = vrot.lane.b32.xlu0 %v108, 1
    %v644 = vpop.permute.xlu0 %643
    %646 = vrot.lane.b32.xlu0 %v89, 1
    %v647 = vpop.permute.xlu0 %646
    %648 = vrot.lane.b32.xlu0 %v113, 1
    %v649 = vpop.permute.xlu0 %648
    %650 = vrot.lane.b32.xlu0 %v90, 1
    %v651 = vpop.permute.xlu0 %650
    %v652 = vsel %vm231, %v647, %v649
    %v653 = vsel %vm231, %v649, %v651
    %v654 = vsel %vm231, %v651, %v644
    %v659 = vsel %vm231, %v644, %v647
    %v660 = vlaneseq
    %v661 = vshrl.u32 %v660, 7
    %v662 = vsub.s32 3, %v661
    %v663 = vrot.slane %v95, %v662
    %v664 = vlaneseq
    %v665 = vshrl.u32 %v664, 7
    %v666 = vsub.s32 3, %v665
    %v667 = vrot.slane %v96, %v666
    %v668 = vlaneseq
    %v669 = vshrl.u32 %v668, 7
    %v670 = vsub.s32 3, %v669
    %v671 = vrot.slane %v97, %v670
    %v672 = vlaneseq
    %v673 = vshrl.u32 %v672, 7
    %v674 = vsub.s32 3, %v673
    %v675 = vrot.slane %v98, %v674
    %v676 = vmul.f32 %v659, %v663
    %v677 = vmul.f32 %v652, %v667
    %v678 = vmul.f32 %v653, %v671
    %v679 = vmul.f32 %v654, %v675
    %v684 = vrot.slane %v602, 4
    %v685 = vrot.slane %v603, 4
    %v686 = vrot.slane %v604, 4
    %v687 = vrot.slane %v605, 4
    %v696 = vrot.slane %v676, 4
    %v697 = vrot.slane %v677, 4
    %v698 = vrot.slane %v678, 4
    %v699 = vrot.slane %v679, 4
    %v704 = vsel %vm342, %v565, %v684
    %v705 = vsel %vm342, %v566, %v685
    %v706 = vsel %vm342, %v567, %v686
    %v707 = vsel %vm342, %v568, %v687
    %v708 = vsel %vm342, %v639, %v696
    %v709 = vsel %vm342, %v640, %v697
    %v710 = vsel %vm342, %v641, %v698
    %v711 = vsel %vm342, %v642, %v699
    %v712 = vpack.c.bf16 %v708, %v704
    %v713 = vpack.c.bf16 %v709, %v705
    %v714 = vpack.c.bf16 %v710, %v706
    %v715 = vpack.c.bf16 %v711, %v707
    %716 = vst [vmem:[#allocation2 + $0x40] sm:$0xff] %v712
    %717 = vst [vmem:[#allocation2 + $0x48] sm:$0xff] %v713
    %718 = vst [vmem:[#allocation2 + $0x50] sm:$0xff] %v714
    %719 = vst [vmem:[#allocation2 + $0x58] sm:$0xff] %v715
    %v720 = vlaneseq
    %v721 = vshrl.u32 %v720, 7
    %v722 = vsub.s32 4, %v721
    %v723 = vrot.slane %v95, %v722
    %v724 = vlaneseq
    %v725 = vshrl.u32 %v724, 7
    %v726 = vsub.s32 4, %v725
    %v727 = vrot.slane %v96, %v726
    %v728 = vlaneseq
    %v729 = vshrl.u32 %v728, 7
    %v730 = vsub.s32 4, %v729
    %v731 = vrot.slane %v97, %v730
    %v732 = vlaneseq
    %v733 = vshrl.u32 %v732, 7
    %v734 = vsub.s32 4, %v733
    %v735 = vrot.slane %v98, %v734
    %v740 = vcombine.low %v723, %v727
    %v741 = vcombine.low %v731, %v735
    %v744 = vmul.f32 %v89, %v740
    %v745 = vmul.f32 %v90, %v741
    %746 = vrot.lane.b32.xlu0 %v89, 127
    %v747 = vpop.permute.xlu0 %746
    %748 = vrot.lane.b32.xlu0 %v113, 127
    %v749 = vpop.permute.xlu0 %748
    %750 = vrot.lane.b32.xlu0 %v90, 127
    %v751 = vpop.permute.xlu0 %750
    %752 = vrot.lane.b32.xlu0 %v108, 127
    %v753 = vpop.permute.xlu0 %752
    %v754 = vsel %vm288, %v747, %v749
    %v755 = vsel %vm288, %v749, %v751
    %v756 = vsel %vm288, %v751, %v753
    %v762 = vsel %vm288, %v753, %v747
    %v763 = vlaneseq
    %v764 = vshrl.u32 %v763, 7
    %v765 = vsub.s32 5, %v764
    %v766 = vrot.slane %v95, %v765
    %v767 = vlaneseq
    %v768 = vshrl.u32 %v767, 7
    %v769 = vsub.s32 5, %v768
    %v770 = vrot.slane %v96, %v769
    %v771 = vlaneseq
    %v772 = vshrl.u32 %v771, 7
    %v773 = vsub.s32 5, %v772
    %v774 = vrot.slane %v97, %v773
    %v775 = vlaneseq
    %v776 = vshrl.u32 %v775, 7
    %v777 = vsub.s32 5, %v776
    %v778 = vrot.slane %v98, %v777
    %v779 = vmul.f32 %v754, %v766
    %v780 = vmul.f32 %v755, %v770
    %v781 = vmul.f32 %v756, %v774
    %v782 = vmul.f32 %v762, %v778
    %783 = vrot.lane.b32.xlu0 %v89, 126
    %v784 = vpop.permute.xlu0 %783
    %785 = vrot.lane.b32.xlu0 %v113, 126
    %v786 = vpop.permute.xlu0 %785
    %787 = vrot.lane.b32.xlu0 %v90, 126
    %v788 = vpop.permute.xlu0 %787
    %789 = vrot.lane.b32.xlu0 %v108, 126
    %v790 = vpop.permute.xlu0 %789
    %v791 = vsel %vm367, %v784, %v786
    %v792 = vsel %vm367, %v786, %v788
    %v793 = vsel %vm367, %v788, %v790
    %v799 = vsel %vm367, %v790, %v784
    %v800 = vlaneseq
    %v801 = vshrl.u32 %v800, 7
    %v802 = vsub.s32 6, %v801
    %v803 = vrot.slane %v95, %v802
    %v804 = vlaneseq
    %v805 = vshrl.u32 %v804, 7
    %v806 = vsub.s32 6, %v805
    %v807 = vrot.slane %v96, %v806
    %v808 = vlaneseq
    %v809 = vshrl.u32 %v808, 7
    %v810 = vsub.s32 6, %v809
    %v811 = vrot.slane %v97, %v810
    %v812 = vlaneseq
    %v813 = vshrl.u32 %v812, 7
    %v814 = vsub.s32 6, %v813
    %v815 = vrot.slane %v98, %v814
    %v816 = vmul.f32 %v791, %v803
    %v817 = vmul.f32 %v792, %v807
    %v818 = vmul.f32 %v793, %v811
    %v819 = vmul.f32 %v799, %v815
    %821 = vrot.lane.b32.xlu0 %v164, 2
    %v822 = vpop.permute.xlu0 %821
    %824 = vrot.lane.b32.xlu0 %v156, 2
    %v825 = vpop.permute.xlu0 %824
    %826 = vrot.lane.b32.xlu0 %v157, 2
    %v827 = vpop.permute.xlu0 %826
    %828 = vrot.lane.b32.xlu0 %v158, 2
    %v829 = vpop.permute.xlu0 %828
    %v830 = vsel %vm193, %v825, %v827
    %v831 = vsel %vm193, %v827, %v829
    %v832 = vsel %vm193, %v829, %v822
    %v837 = vsel %vm193, %v822, %v825
    %v838 = vlaneseq
    %v839 = vshrl.u32 %v838, 7
    %v840 = vsub.s32 7, %v839
    %v841 = vrot.slane %v95, %v840
    %v842 = vlaneseq
    %v843 = vshrl.u32 %v842, 7
    %v844 = vsub.s32 7, %v843
    %v845 = vrot.slane %v96, %v844
    %v846 = vlaneseq
    %v847 = vshrl.u32 %v846, 7
    %v848 = vsub.s32 7, %v847
    %v849 = vrot.slane %v97, %v848
    %v850 = vlaneseq
    %v851 = vshrl.u32 %v850, 7
    %v852 = vsub.s32 7, %v851
    %v853 = vrot.slane %v98, %v852
    %v854 = vmul.f32 %v837, %v841
    %v855 = vmul.f32 %v830, %v845
    %v856 = vmul.f32 %v831, %v849
    %v857 = vmul.f32 %v832, %v853
    %v860 = vcombine.high %v744, %v744
    %v861 = vcombine.high %v745, %v745
    %v868 = vrot.slane %v779, 4
    %v869 = vrot.slane %v780, 4
    %v870 = vrot.slane %v781, 4
    %v871 = vrot.slane %v782, 4
    %v880 = vrot.slane %v854, 4
    %v881 = vrot.slane %v855, 4
    %v882 = vrot.slane %v856, 4
    %v883 = vrot.slane %v857, 4
    %v888 = vsel %vm342, %v744, %v868
    %v889 = vsel %vm342, %v860, %v869
    %v890 = vsel %vm342, %v745, %v870
    %v891 = vsel %vm342, %v861, %v871
    %v892 = vsel %vm342, %v816, %v880
    %v893 = vsel %vm342, %v817, %v881
    %v894 = vsel %vm342, %v818, %v882
    %v895 = vsel %vm342, %v819, %v883
    %v896 = vpack.c.bf16 %v892, %v888
    %v897 = vpack.c.bf16 %v893, %v889
    %v898 = vpack.c.bf16 %v894, %v890
    %v899 = vpack.c.bf16 %v895, %v891
    %900 = vst [vmem:[#allocation2 + $0x60] sm:$0xff] %v896
    %901 = vst [vmem:[#allocation2 + $0x68] sm:$0xff] %v897
    %902 = vst [vmem:[#allocation2 + $0x70] sm:$0xff] %v898
    %903 = vst [vmem:[#allocation2 + $0x78] sm:$0xff] %v899
    %904 = vrot.lane.b32.xlu0 %v164, 1
    %v905 = vpop.permute.xlu0 %904
    %907 = vrot.lane.b32.xlu0 %v156, 1
    %v908 = vpop.permute.xlu0 %907
    %909 = vrot.lane.b32.xlu0 %v157, 1
    %v910 = vpop.permute.xlu0 %909
    %911 = vrot.lane.b32.xlu0 %v158, 1
    %v912 = vpop.permute.xlu0 %911
    %v913 = vsel %vm231, %v908, %v910
    %v914 = vsel %vm231, %v910, %v912
    %v915 = vsel %vm231, %v912, %v905
    %v920 = vsel %vm231, %v905, %v908
    %v921 = vlaneseq
    %v922 = vshrl.u32 %v921, 7
    %v923 = vsub.s32 0, %v922
    %v924 = vrot.slane %v99, %v923
    %v925 = vlaneseq
    %v926 = vshrl.u32 %v925, 7
    %v927 = vsub.s32 0, %v926
    %v928 = vrot.slane %v100, %v927
    %v929 = vlaneseq
    %v930 = vshrl.u32 %v929, 7
    %v931 = vsub.s32 0, %v930
    %v932 = vrot.slane %v101, %v931
    %v933 = vlaneseq
    %v934 = vshrl.u32 %v933, 7
    %v935 = vsub.s32 0, %v934
    %v936 = vrot.slane %v102, %v935
    %v937 = vmul.f32 %v920, %v924
    %v938 = vmul.f32 %v913, %v928
    %v939 = vmul.f32 %v914, %v932
    %v940 = vmul.f32 %v915, %v936
    %v941 = vlaneseq
    %v942 = vshrl.u32 %v941, 7
    %v943 = vsub.s32 1, %v942
    %v944 = vrot.slane %v99, %v943
    %v945 = vlaneseq
    %v946 = vshrl.u32 %v945, 7
    %v947 = vsub.s32 1, %v946
    %v948 = vrot.slane %v100, %v947
    %v949 = vlaneseq
    %v950 = vshrl.u32 %v949, 7
    %v951 = vsub.s32 1, %v950
    %v952 = vrot.slane %v101, %v951
    %v953 = vlaneseq
    %v954 = vshrl.u32 %v953, 7
    %v955 = vsub.s32 1, %v954
    %v956 = vrot.slane %v102, %v955
    %v957 = vmul.f32 %v156, %v944
    %v958 = vmul.f32 %v157, %v948
    %v959 = vmul.f32 %v158, %v952
    %v960 = vmul.f32 %v164, %v956
    %961 = vrot.lane.b32.xlu0 %v156, 127
    %v962 = vpop.permute.xlu0 %961
    %963 = vrot.lane.b32.xlu0 %v157, 127
    %v964 = vpop.permute.xlu0 %963
    %965 = vrot.lane.b32.xlu0 %v158, 127
    %v966 = vpop.permute.xlu0 %965
    %967 = vrot.lane.b32.xlu0 %v164, 127
    %v968 = vpop.permute.xlu0 %967
    %v969 = vsel %vm288, %v962, %v964
    %v970 = vsel %vm288, %v964, %v966
    %v971 = vsel %vm288, %v966, %v968
    %v977 = vsel %vm288, %v968, %v962
    %v978 = vlaneseq
    %v979 = vshrl.u32 %v978, 7
    %v980 = vsub.s32 2, %v979
    %v981 = vrot.slane %v99, %v980
    %v982 = vlaneseq
    %v983 = vshrl.u32 %v982, 7
    %v984 = vsub.s32 2, %v983
    %v985 = vrot.slane %v100, %v984
    %v986 = vlaneseq
    %v987 = vshrl.u32 %v986, 7
    %v988 = vsub.s32 2, %v987
    %v989 = vrot.slane %v101, %v988
    %v990 = vlaneseq
    %v991 = vshrl.u32 %v990, 7
    %v992 = vsub.s32 2, %v991
    %v993 = vrot.slane %v102, %v992
    %v994 = vmul.f32 %v969, %v981
    %v995 = vmul.f32 %v970, %v985
    %v996 = vmul.f32 %v971, %v989
    %v997 = vmul.f32 %v977, %v993
    %998 = vrot.lane.b32.xlu0 %v156, 126
    %v999 = vpop.permute.xlu0 %998
    %1000 = vrot.lane.b32.xlu0 %v157, 126
    %v1001 = vpop.permute.xlu0 %1000
    %1002 = vrot.lane.b32.xlu0 %v158, 126
    %v1003 = vpop.permute.xlu0 %1002
    %1004 = vrot.lane.b32.xlu0 %v164, 126
    %v1005 = vpop.permute.xlu0 %1004
    %v1006 = vsel %vm367, %v999, %v1001
    %v1007 = vsel %vm367, %v1001, %v1003
    %v1008 = vsel %vm367, %v1003, %v1005
    %v1014 = vsel %vm367, %v1005, %v999
    %v1015 = vlaneseq
    %v1016 = vshrl.u32 %v1015, 7
    %v1017 = vsub.s32 3, %v1016
    %v1018 = vrot.slane %v99, %v1017
    %v1019 = vlaneseq
    %v1020 = vshrl.u32 %v1019, 7
    %v1021 = vsub.s32 3, %v1020
    %v1022 = vrot.slane %v100, %v1021
    %v1023 = vlaneseq
    %v1024 = vshrl.u32 %v1023, 7
    %v1025 = vsub.s32 3, %v1024
    %v1026 = vrot.slane %v101, %v1025
    %v1027 = vlaneseq
    %v1028 = vshrl.u32 %v1027, 7
    %v1029 = vsub.s32 3, %v1028
    %v1030 = vrot.slane %v102, %v1029
    %v1031 = vmul.f32 %v1006, %v1018
    %v1032 = vmul.f32 %v1007, %v1022
    %v1033 = vmul.f32 %v1008, %v1026
    %v1034 = vmul.f32 %v1014, %v1030
    %v1039 = vrot.slane %v957, 4
    %v1040 = vrot.slane %v958, 4
    %v1041 = vrot.slane %v959, 4
    %v1042 = vrot.slane %v960, 4
    %v1051 = vrot.slane %v1031, 4
    %v1052 = vrot.slane %v1032, 4
    %v1053 = vrot.slane %v1033, 4
    %v1054 = vrot.slane %v1034, 4
    %v1059 = vsel %vm342, %v937, %v1039
    %v1060 = vsel %vm342, %v938, %v1040
    %v1061 = vsel %vm342, %v939, %v1041
    %v1062 = vsel %vm342, %v940, %v1042
    %v1063 = vsel %vm342, %v994, %v1051
    %v1064 = vsel %vm342, %v995, %v1052
    %v1065 = vsel %vm342, %v996, %v1053
    %v1066 = vsel %vm342, %v997, %v1054
    %v1067 = vpack.c.bf16 %v1063, %v1059
    %v1068 = vpack.c.bf16 %v1064, %v1060
    %v1069 = vpack.c.bf16 %v1065, %v1061
    %v1070 = vpack.c.bf16 %v1066, %v1062
    %1071 = vst [vmem:[#allocation2 + $0x80] sm:$0xff] %v1067
    %1072 = vst [vmem:[#allocation2 + $0x88] sm:$0xff] %v1068
    %1073 = vst [vmem:[#allocation2 + $0x90] sm:$0xff] %v1069
    %1074 = vst [vmem:[#allocation2 + $0x98] sm:$0xff] %v1070
    %1076 = vrot.lane.b32.xlu0 %v182, 2
    %v1077 = vpop.permute.xlu0 %1076
    %1079 = vrot.lane.b32.xlu0 %v174, 2
    %v1080 = vpop.permute.xlu0 %1079
    %1081 = vrot.lane.b32.xlu0 %v175, 2
    %v1082 = vpop.permute.xlu0 %1081
    %1083 = vrot.lane.b32.xlu0 %v176, 2
    %v1084 = vpop.permute.xlu0 %1083
    %v1085 = vsel %vm193, %v1080, %v1082
    %v1086 = vsel %vm193, %v1082, %v1084
    %v1087 = vsel %vm193, %v1084, %v1077
    %v1092 = vsel %vm193, %v1077, %v1080
    %v1093 = vlaneseq
    %v1094 = vshrl.u32 %v1093, 7
    %v1095 = vsub.s32 4, %v1094
    %v1096 = vrot.slane %v99, %v1095
    %v1097 = vlaneseq
    %v1098 = vshrl.u32 %v1097, 7
    %v1099 = vsub.s32 4, %v1098
    %v1100 = vrot.slane %v100, %v1099
    %v1101 = vlaneseq
    %v1102 = vshrl.u32 %v1101, 7
    %v1103 = vsub.s32 4, %v1102
    %v1104 = vrot.slane %v101, %v1103
    %v1105 = vlaneseq
    %v1106 = vshrl.u32 %v1105, 7
    %v1107 = vsub.s32 4, %v1106
    %v1108 = vrot.slane %v102, %v1107
    %v1109 = vmul.f32 %v1092, %v1096
    %v1110 = vmul.f32 %v1085, %v1100
    %v1111 = vmul.f32 %v1086, %v1104
    %v1112 = vmul.f32 %v1087, %v1108
    %1113 = vrot.lane.b32.xlu0 %v182, 1
    %v1114 = vpop.permute.xlu0 %1113
    %1116 = vrot.lane.b32.xlu0 %v174, 1
    %v1117 = vpop.permute.xlu0 %1116
    %1118 = vrot.lane.b32.xlu0 %v175, 1
    %v1119 = vpop.permute.xlu0 %1118
    %1120 = vrot.lane.b32.xlu0 %v176, 1
    %v1121 = vpop.permute.xlu0 %1120
    %v1122 = vsel %vm231, %v1117, %v1119
    %v1123 = vsel %vm231, %v1119, %v1121
    %v1124 = vsel %vm231, %v1121, %v1114
    %v1129 = vsel %vm231, %v1114, %v1117
    %v1130 = vlaneseq
    %v1131 = vshrl.u32 %v1130, 7
    %v1132 = vsub.s32 5, %v1131
    %v1133 = vrot.slane %v99, %v1132
    %v1134 = vlaneseq
    %v1135 = vshrl.u32 %v1134, 7
    %v1136 = vsub.s32 5, %v1135
    %v1137 = vrot.slane %v100, %v1136
    %v1138 = vlaneseq
    %v1139 = vshrl.u32 %v1138, 7
    %v1140 = vsub.s32 5, %v1139
    %v1141 = vrot.slane %v101, %v1140
    %v1142 = vlaneseq
    %v1143 = vshrl.u32 %v1142, 7
    %v1144 = vsub.s32 5, %v1143
    %v1145 = vrot.slane %v102, %v1144
    %v1146 = vmul.f32 %v1129, %v1133
    %v1147 = vmul.f32 %v1122, %v1137
    %v1148 = vmul.f32 %v1123, %v1141
    %v1149 = vmul.f32 %v1124, %v1145
    %v1150 = vlaneseq
    %v1151 = vshrl.u32 %v1150, 7
    %v1152 = vsub.s32 6, %v1151
    %v1153 = vrot.slane %v99, %v1152
    %v1154 = vlaneseq
    %v1155 = vshrl.u32 %v1154, 7
    %v1156 = vsub.s32 6, %v1155
    %v1157 = vrot.slane %v100, %v1156
    %v1158 = vlaneseq
    %v1159 = vshrl.u32 %v1158, 7
    %v1160 = vsub.s32 6, %v1159
    %v1161 = vrot.slane %v101, %v1160
    %v1162 = vlaneseq
    %v1163 = vshrl.u32 %v1162, 7
    %v1164 = vsub.s32 6, %v1163
    %v1165 = vrot.slane %v102, %v1164
    %v1166 = vmul.f32 %v174, %v1153
    %v1167 = vmul.f32 %v175, %v1157
    %v1168 = vmul.f32 %v176, %v1161
    %v1169 = vmul.f32 %v182, %v1165
    %1170 = vrot.lane.b32.xlu0 %v174, 127
    %v1171 = vpop.permute.xlu0 %1170
    %1172 = vrot.lane.b32.xlu0 %v175, 127
    %v1173 = vpop.permute.xlu0 %1172
    %1174 = vrot.lane.b32.xlu0 %v176, 127
    %v1175 = vpop.permute.xlu0 %1174
    %1176 = vrot.lane.b32.xlu0 %v182, 127
    %v1177 = vpop.permute.xlu0 %1176
    %v1178 = vsel %vm288, %v1171, %v1173
    %v1179 = vsel %vm288, %v1173, %v1175
    %v1180 = vsel %vm288, %v1175, %v1177
    %v1186 = vsel %vm288, %v1177, %v1171
    %v1187 = vlaneseq
    %v1188 = vshrl.u32 %v1187, 7
    %v1189 = vsub.s32 7, %v1188
    %v1190 = vrot.slane %v99, %v1189
    %v1191 = vlaneseq
    %v1192 = vshrl.u32 %v1191, 7
    %v1193 = vsub.s32 7, %v1192
    %v1194 = vrot.slane %v100, %v1193
    %v1195 = vlaneseq
    %v1196 = vshrl.u32 %v1195, 7
    %v1197 = vsub.s32 7, %v1196
    %v1198 = vrot.slane %v101, %v1197
    %v1199 = vlaneseq
    %v1200 = vshrl.u32 %v1199, 7
    %v1201 = vsub.s32 7, %v1200
    %v1202 = vrot.slane %v102, %v1201
    %v1203 = vmul.f32 %v1178, %v1190
    %v1204 = vmul.f32 %v1179, %v1194
    %v1205 = vmul.f32 %v1180, %v1198
    %v1206 = vmul.f32 %v1186, %v1202
    %v1211 = vrot.slane %v1146, 4
    %v1212 = vrot.slane %v1147, 4
    %v1213 = vrot.slane %v1148, 4
    %v1214 = vrot.slane %v1149, 4
    %v1223 = vrot.slane %v1203, 4
    %v1224 = vrot.slane %v1204, 4
    %v1225 = vrot.slane %v1205, 4
    %v1226 = vrot.slane %v1206, 4
    %v1231 = vsel %vm342, %v1109, %v1211
    %v1232 = vsel %vm342, %v1110, %v1212
    %v1233 = vsel %vm342, %v1111, %v1213
    %v1234 = vsel %vm342, %v1112, %v1214
    %v1235 = vsel %vm342, %v1166, %v1223
    %v1236 = vsel %vm342, %v1167, %v1224
    %v1237 = vsel %vm342, %v1168, %v1225
    %v1238 = vsel %vm342, %v1169, %v1226
    %v1239 = vpack.c.bf16 %v1235, %v1231
    %v1240 = vpack.c.bf16 %v1236, %v1232
    %v1241 = vpack.c.bf16 %v1237, %v1233
    %v1242 = vpack.c.bf16 %v1238, %v1234
    %1243 = vst [vmem:[#allocation2 + $0xa0] sm:$0xff] %v1239
    %1244 = vst [vmem:[#allocation2 + $0xa8] sm:$0xff] %v1240
    %1245 = vst [vmem:[#allocation2 + $0xb0] sm:$0xff] %v1241
    %1246 = vst [vmem:[#allocation2 + $0xb8] sm:$0xff] %v1242
    %1247 = vrot.lane.b32.xlu0 %v174, 126
    %v1248 = vpop.permute.xlu0 %1247
    %1249 = vrot.lane.b32.xlu0 %v175, 126
    %v1250 = vpop.permute.xlu0 %1249
    %1251 = vrot.lane.b32.xlu0 %v176, 126
    %v1252 = vpop.permute.xlu0 %1251
    %1253 = vrot.lane.b32.xlu0 %v182, 126
    %v1254 = vpop.permute.xlu0 %1253
    %v1255 = vsel %vm367, %v1248, %v1250
    %v1256 = vsel %vm367, %v1250, %v1252
    %v1257 = vsel %vm367, %v1252, %v1254
    %v1263 = vsel %vm367, %v1254, %v1248
    %v1264 = vlaneseq
    %v1265 = vshrl.u32 %v1264, 7
    %v1266 = vsub.s32 0, %v1265
    %v1267 = vrot.slane %v103, %v1266
    %v1268 = vlaneseq
    %v1269 = vshrl.u32 %v1268, 7
    %v1270 = vsub.s32 0, %v1269
    %v1271 = vrot.slane %v104, %v1270
    %v1272 = vlaneseq
    %v1273 = vshrl.u32 %v1272, 7
    %v1274 = vsub.s32 0, %v1273
    %v1275 = vrot.slane %v105, %v1274
    %v1276 = vlaneseq
    %v1277 = vshrl.u32 %v1276, 7
    %v1278 = vsub.s32 0, %v1277
    %v1279 = vrot.slane %v106, %v1278
    %v1280 = vmul.f32 %v1255, %v1267
    %v1281 = vmul.f32 %v1256, %v1271
    %v1282 = vmul.f32 %v1257, %v1275
    %v1283 = vmul.f32 %v1263, %v1279
    %v1284 = vsel %vm342, %v1280, 0.0
    %v1285 = vsel %vm342, %v1281, 0.0
    %v1286 = vsel %vm342, %v1282, 0.0
    %v1287 = vsel %vm342, %v1283, 0.0
    %v1288 = vpack.c.bf16 0.0, %v1284
    %v1289 = vpack.c.bf16 0.0, %v1285
    %v1290 = vpack.c.bf16 0.0, %v1286
    %v1291 = vpack.c.bf16 0.0, %v1287
    %v1292 = vpack.c.bf16 0.0, 0.0
    %1293 = vst [vmem:[#allocation2 + $0xc0] sm:$0xff] %v1288
    %1294 = vst [vmem:[#allocation2 + $0xc8] sm:$0xff] %v1289
    %1295 = vst [vmem:[#allocation2 + $0xd0] sm:$0xff] %v1290
    %1296 = vst [vmem:[#allocation2 + $0xd8] sm:$0xff] %v1291
    %1297 = vst [vmem:[#allocation2 + $0xe0] sm:$0xff] %v1292
    %1298 = vst [vmem:[#allocation2 + $0xe8] sm:$0xff] %v1292
    %1299 = vst [vmem:[#allocation2 + $0xf0] sm:$0xff] %v1292
    %1300 = vst [vmem:[#allocation2 + $0xf8] sm:$0xff] %v1292
    %v1301 = vld [vmem:[%s1] sm:$0xf]
    %v1302 = vld [vmem:[%s1 + $0x4] sm:$0xf]
    %v1303 = vld [vmem:[%s1 + $0x8] sm:$0xf]
    %v1304 = vld [vmem:[#allocation2] sm:$0xff]
    %v1305 = vld [vmem:[#allocation2 + $0x8] sm:$0xff]
    %v1306 = vld [vmem:[#allocation2 + $0x10] sm:$0xff]
    %v1307 = vld [vmem:[#allocation2 + $0x18] sm:$0xff]
    %v1308 = vld [vmem:[#allocation2 + $0x20] sm:$0xff]
    %v1309 = vld [vmem:[#allocation2 + $0x28] sm:$0xff]
    %v1310 = vld [vmem:[#allocation2 + $0x30] sm:$0xff]
    %v1311 = vld [vmem:[#allocation2 + $0x38] sm:$0xff]
    %v1312 = vld [vmem:[#allocation2 + $0x40] sm:$0xff]
    %v1313 = vld [vmem:[#allocation2 + $0x48] sm:$0xff]
    %v1314 = vld [vmem:[#allocation2 + $0x50] sm:$0xff]
    %v1315 = vld [vmem:[#allocation2 + $0x58] sm:$0xff]
    %v1316 = vld [vmem:[#allocation2 + $0x60] sm:$0xff]
    %v1317 = vld [vmem:[#allocation2 + $0x68] sm:$0xff]
    %v1318 = vld [vmem:[#allocation2 + $0x70] sm:$0xff]
    %v1319 = vld [vmem:[#allocation2 + $0x78] sm:$0xff]
    %v1320 = vld [vmem:[#allocation2 + $0x80] sm:$0xff]
    %v1321 = vld [vmem:[#allocation2 + $0x88] sm:$0xff]
    %v1322 = vld [vmem:[#allocation2 + $0x90] sm:$0xff]
    %v1323 = vld [vmem:[#allocation2 + $0x98] sm:$0xff]
    %v1324 = vld [vmem:[#allocation2 + $0xa0] sm:$0xff]
    %v1325 = vld [vmem:[#allocation2 + $0xa8] sm:$0xff]
    %v1326 = vld [vmem:[#allocation2 + $0xb0] sm:$0xff]
    %v1327 = vld [vmem:[#allocation2 + $0xb8] sm:$0xff]
    %v1328 = vld [vmem:[#allocation2 + $0xc0] sm:$0xff]
    %v1329 = vld [vmem:[#allocation2 + $0xc8] sm:$0xff]
    %v1330 = vld [vmem:[#allocation2 + $0xd0] sm:$0xff]
    %v1331 = vld [vmem:[#allocation2 + $0xd8] sm:$0xff]
    %v1332 = vld [vmem:[#allocation2 + $0xe0] sm:$0xff]
    %v1333 = vld [vmem:[#allocation2 + $0xe8] sm:$0xff]
    %v1334 = vld [vmem:[#allocation2 + $0xf0] sm:$0xff]
    %v1335 = vld [vmem:[#allocation2 + $0xf8] sm:$0xff]
    %v1336 = vld [vmem:[%s2] sm:$0xff]
    %v1337 = vld [vmem:[%s2 + $0x8] sm:$0xff]
    %v1338 = vld [vmem:[%s2 + $0x10] sm:$0xff]
    %1340 = vset.pattern.permute.xlu0 0
    %1341 = vperm.xlu0 %1340, %v1336
    %v1342 = vpop.permute.xlu0 %1341
    %1345 = vset.pattern.permute.xlu0 0
    %1346 = vperm.xlu0 %1345, %v1337
    %v1347 = vpop.permute.xlu0 %1346
    %1350 = vset.pattern.permute.xlu0 0
    %1351 = vperm.xlu0 %1350, %v1338
    %v1352 = vpop.permute.xlu0 %1351
    %v1357 = vunpack.c.l.b16 %v1301
    %v1358 = vunpack.c.l.b16 %v1302
    %v1359 = vunpack.c.l.b16 %v1303
    %v1360 = vpack.c.b16 %v1358, %v1357
    %v1361 = vpack.c.b16 %v1359, %v1359
    %1364 = vmatprep.subr.bf16.mxu0 %v1305
    %1365 = vmatpush1.bf16.msra.mxu0 %v1304
    %1366 = vmatprep.subr.bf16.mxu0 %v1309
    %1367 = vmatpush1.bf16.msra.mxu0 %v1308
    %1368 = vmatprep.subr.bf16.mxu0 %v1313
    %1369 = vmatpush1.bf16.msra.mxu0 %v1312
    %1370 = vmatprep.subr.bf16.mxu0 %v1317
    %1371 = vmatpush1.bf16.msra.mxu0 %v1316
    %1372 = vmatprep.subr.bf16.mxu0 %v1321
    %1373 = vmatpush1.bf16.msra.mxu0 %v1320
    %1374 = vmatprep.subr.bf16.mxu0 %v1325
    %1375 = vmatpush1.bf16.msra.mxu0 %v1324
    %1376 = vmatprep.subr.bf16.mxu0 %v1329
    %1377 = vmatpush1.bf16.msra.mxu0 %v1328
    %1378 = vmatprep.subr.bf16.mxu0 %v1333
    %1379 = vmatpush1.bf16.msra.mxu0 %v1332
    %1380 = vmatprep.subr.bf16.mxu0 0
    %1381 = vmatpush1.bf16.msra.mxu0 0
    %1382 = vmatprep.subr.bf16.mxu0 0
    %1383 = vmatpush1.bf16.msra.mxu0 0
    %1384 = vmatprep.subr.bf16.mxu0 0
    %1385 = vmatpush1.bf16.msra.mxu0 0
    %1386 = vmatprep.subr.bf16.mxu0 0
    %1387 = vmatpush1.bf16.msra.mxu0 0
    %1388 = vmatprep.subr.bf16.mxu0 0
    %1389 = vmatpush1.bf16.msra.mxu0 0
    %1390 = vmatprep.subr.bf16.mxu0 0
    %1391 = vmatpush1.bf16.msra.mxu0 0
    %1392 = vmatprep.subr.bf16.mxu0 0
    %1393 = vmatpush1.bf16.msra.mxu0 0
    %1394 = vmatprep.subr.bf16.mxu0 0
    %1395 = vmatpush1.bf16.msra.mxu0 0
    %1396 = vmatprep.mubr.bf16.mxu0 0
    %1397 = vmatmul.mubr.bf16.gmra.mrb[0].mxu0 %v1360
    %v1398 = vpop.f32.mrb[0].mxu0
    %v1399 = vadd.f32 %v1342, %v1398
    %v1400 = vpop.f32.mrb[0].mxu0
    %v1401 = vadd.f32 %v1342, %v1400
    %v1402 = vpop.f32.mrb[0].mxu0
    %v1403 = vadd.f32 %v1347, %v1402
    %v1404 = vpop.f32.mrb[0].mxu0
    %v1405 = vadd.f32 %v1347, %v1404
    %1406 = vmatprep.mubr.bf16.mxu0 0
    %1407 = vmatmul.mubr.bf16.gmra.mrb[0].mxu0 %v1361
    %v1408 = vpop.f32.mrb[0].mxu0
    %v1409 = vadd.f32 %v1352, %v1408
    %v1410 = vpop.f32.mrb[0].mxu0
    %v1411 = vadd.f32 %v1352, %v1410
    %v1412 = vpop.f32.mrb[0].mxu0
    %v1413 = vpop.f32.mrb[0].mxu0
    %1414 = vdwg.mxu0
    %1415 = vmatprep.subr.bf16.mxu0 %v1307
    %1416 = vmatpush1.bf16.msra.mxu0 %v1306
    %1417 = vmatprep.subr.bf16.mxu0 %v1311
    %1418 = vmatpush1.bf16.msra.mxu0 %v1310
    %1419 = vmatprep.subr.bf16.mxu0 %v1315
    %1420 = vmatpush1.bf16.msra.mxu0 %v1314
    %1421 = vmatprep.subr.bf16.mxu0 %v1319
    %1422 = vmatpush1.bf16.msra.mxu0 %v1318
    %1423 = vmatprep.subr.bf16.mxu0 %v1323
    %1424 = vmatpush1.bf16.msra.mxu0 %v1322
    %1425 = vmatprep.subr.bf16.mxu0 %v1327
    %1426 = vmatpush1.bf16.msra.mxu0 %v1326
    %1427 = vmatprep.subr.bf16.mxu0 %v1331
    %1428 = vmatpush1.bf16.msra.mxu0 %v1330
    %1429 = vmatprep.subr.bf16.mxu0 %v1335
    %1430 = vmatpush1.bf16.msra.mxu0 %v1334
    %1431 = vmatprep.subr.bf16.mxu0 0
    %1432 = vmatpush1.bf16.msra.mxu0 0
    %1433 = vmatprep.subr.bf16.mxu0 0
    %1434 = vmatpush1.bf16.msra.mxu0 0
    %1435 = vmatprep.subr.bf16.mxu0 0
    %1436 = vmatpush1.bf16.msra.mxu0 0
    %1437 = vmatprep.subr.bf16.mxu0 0
    %1438 = vmatpush1.bf16.msra.mxu0 0
    %1439 = vmatprep.subr.bf16.mxu0 0
    %1440 = vmatpush1.bf16.msra.mxu0 0
    %1441 = vmatprep.subr.bf16.mxu0 0
    %1442 = vmatpush1.bf16.msra.mxu0 0
    %1443 = vmatprep.subr.bf16.mxu0 0
    %1444 = vmatpush1.bf16.msra.mxu0 0
    %1445 = vmatprep.subr.bf16.mxu0 0
    %1446 = vmatpush1.bf16.msra.mxu0 0
    %1447 = vmatprep.mubr.bf16.mxu0 0
    %1448 = vmatmul.mubr.bf16.gmra.mrb[0].mxu0 %v1360
    %v1449 = vpop.f32.mrb[0].mxu0
    %v1450 = vadd.f32 %v1342, %v1449
    %v1451 = vpop.f32.mrb[0].mxu0
    %v1452 = vadd.f32 %v1342, %v1451
    %v1453 = vpop.f32.mrb[0].mxu0
    %v1454 = vadd.f32 %v1347, %v1453
    %v1455 = vpop.f32.mrb[0].mxu0
    %v1456 = vadd.f32 %v1347, %v1455
    %1457 = vmatprep.mubr.bf16.mxu0 0
    %1458 = vmatmul.mubr.bf16.gmra.mrb[0].mxu0 %v1361
    %v1459 = vpop.f32.mrb[0].mxu0
    %v1460 = vadd.f32 %v1352, %v1459
    %v1461 = vpop.f32.mrb[0].mxu0
    %v1462 = vadd.f32 %v1352, %v1461
    %v1463 = vpop.f32.mrb[0].mxu0
    %v1464 = vpop.f32.mrb[0].mxu0
    %1465 = vdwg.mxu0
    %v1466 = vmax.f32 %v1399, 0.0
    %v1467 = vmax.f32 %v1401, 0.0
    %v1468 = vmax.f32 %v1450, 0.0
    %v1469 = vmax.f32 %v1452, 0.0
    %v1470 = vmax.f32 %v1403, 0.0
    %v1471 = vmax.f32 %v1405, 0.0
    %v1472 = vmax.f32 %v1454, 0.0
    %v1473 = vmax.f32 %v1456, 0.0
    %v1474 = vmax.f32 %v1409, 0.0
    %v1475 = vmax.f32 %v1411, 0.0
    %v1476 = vmax.f32 %v1460, 0.0
    %v1477 = vmax.f32 %v1462, 0.0
    %1478 = vst [vmem:[#allocation11] sm:$0xff] %v1466
    %1479 = vst [vmem:[#allocation11 + $0x8] sm:$0xff] %v1467
    %1480 = vst [vmem:[#allocation11 + $0x10] sm:$0xff] %v1468
    %1481 = vst [vmem:[#allocation11 + $0x18] sm:$0xff] %v1469
    %1482 = vst [vmem:[#allocation11 + $0x20] sm:$0xff] %v1470
    %1483 = vst [vmem:[#allocation11 + $0x28] sm:$0xff] %v1471
    %1484 = vst [vmem:[#allocation11 + $0x30] sm:$0xff] %v1472
    %1485 = vst [vmem:[#allocation11 + $0x38] sm:$0xff] %v1473
    %1486 = vst [vmem:[#allocation11 + $0x40] sm:$0xff] %v1474
    %1487 = vst [vmem:[#allocation11 + $0x48] sm:$0xff] %v1475
    %1488 = vst [vmem:[#allocation11 + $0x50] sm:$0xff] %v1476
    %1489 = vst [vmem:[#allocation11 + $0x58] sm:$0xff] %v1477
    %v1491 = vcombine.low %v754, %v755
    %v1492 = vcombine.low %v756, %v762
    %v1495 = vmax.f32 %v89, %v1491
    %v1496 = vmax.f32 %v90, %v1492
    %v1499 = vcombine.high %v1495, %v1495
    %v1500 = vcombine.high %v1496, %v1496
    %1501 = vrot.lane.b32.xlu0 %v1495, 112
    %v1502 = vpop.permute.xlu0 %1501
    %1503 = vrot.lane.b32.xlu0 %v1499, 112
    %v1504 = vpop.permute.xlu0 %1503
    %1505 = vrot.lane.b32.xlu0 %v1496, 112
    %v1506 = vpop.permute.xlu0 %1505
    %1507 = vrot.lane.b32.xlu0 %v1500, 112
    %v1508 = vpop.permute.xlu0 %1507
    %v1509 = vsel %vm155, %v1502, %v1504
    %v1510 = vsel %vm155, %v1504, %v1506
    %v1511 = vsel %vm155, %v1506, %v1508
    %v1514 = vsel %vm155, %v1508, %v1502
    %v1516 = vcombine.low %v1509, %v1510
    %v1517 = vcombine.low %v1511, %v1514
    %v1520 = vmax.f32 %v1495, %v1516
    %v1521 = vmax.f32 %v1496, %v1517
    %v1524 = vcombine.high %v1520, %v1520
    %v1525 = vcombine.high %v1521, %v1521
    %v1528 = vpack.c.bf16 %v1520, %v1520
    %v1529 = vpack.c.bf16 %v1524, %v1524
    %v1530 = vpack.c.bf16 %v1521, %v1521
    %v1531 = vpack.c.bf16 %v1525, %v1525
    %v1532 = vld [vmem:[#allocation6] sm:$0xf]
    %v1533 = vld [vmem:[#allocation6 + $0x4] sm:$0xf]
    %v1534 = vld [vmem:[#allocation6 + $0x8] sm:$0xf]
    %v1535 = vld [vmem:[#allocation6 + $0xc] sm:$0xf]
    %v1536 = vld [vmem:[#allocation6 + $0x10] sm:$0xf]
    %v1537 = vld [vmem:[#allocation6 + $0x14] sm:$0xf]
    %v1538 = vld [vmem:[#allocation6 + $0x18] sm:$0xf]
    %v1539 = vld [vmem:[#allocation6 + $0x1c] sm:$0xf]
    %v1540 = vld [vmem:[#allocation6 + $0x20] sm:$0xf]
    %v1541 = vld [vmem:[#allocation6 + $0x24] sm:$0xf]
    %v1542 = vld [vmem:[#allocation6 + $0x28] sm:$0xf]
    %v1543 = vld [vmem:[#allocation6 + $0x2c] sm:$0xf]
    %v1544 = vld [vmem:[#allocation6 + $0x30] sm:$0xf]
    %v1545 = vld [vmem:[#allocation6 + $0x34] sm:$0xf]
    %v1546 = vld [vmem:[#allocation6 + $0x38] sm:$0xf]
    %v1547 = vld [vmem:[#allocation6 + $0x3c] sm:$0xf]
    %v1548 = vld [vmem:[#allocation6 + $0x40] sm:$0xf]
    %v1549 = vld [vmem:[#allocation6 + $0x44] sm:$0xf]
    %v1550 = vld [vmem:[#allocation6 + $0x48] sm:$0xf]
    %v1551 = vld [vmem:[#allocation6 + $0x4c] sm:$0xf]
    %v1552 = vld [vmem:[#allocation6 + $0x50] sm:$0xf]
    %v1553 = vld [vmem:[#allocation6 + $0x54] sm:$0xf]
    %v1554 = vld [vmem:[#allocation6 + $0x58] sm:$0xf]
    %v1555 = vld [vmem:[#allocation6 + $0x5c] sm:$0xf]
    %v1556 = vld [vmem:[#allocation6 + $0x60] sm:$0xf]
    %v1557 = vld [vmem:[#allocation6 + $0x64] sm:$0xf]
    %v1558 = vld [vmem:[#allocation6 + $0x68] sm:$0xf]
    %v1559 = vld [vmem:[#allocation6 + $0x6c] sm:$0xf]
    %v1560 = vld [vmem:[#allocation6 + $0x70] sm:$0xf]
    %v1561 = vld [vmem:[#allocation6 + $0x74] sm:$0xf]
    %v1562 = vld [vmem:[#allocation6 + $0x78] sm:$0xf]
    %v1563 = vld [vmem:[#allocation6 + $0x7c] sm:$0xf]
    %v1564 = vld [vmem:[#allocation6 + $0x80] sm:$0xf]
    %v1565 = vld [vmem:[#allocation6 + $0x84] sm:$0xf]
    %v1566 = vld [vmem:[#allocation6 + $0x88] sm:$0xf]
    %v1567 = vld [vmem:[#allocation6 + $0x8c] sm:$0xf]
    %v1568 = vld [vmem:[#allocation6 + $0x90] sm:$0xf]
    %v1569 = vld [vmem:[#allocation6 + $0x94] sm:$0xf]
    %v1570 = vld [vmem:[#allocation6 + $0x98] sm:$0xf]
    %v1571 = vld [vmem:[#allocation6 + $0x9c] sm:$0xf]
    %v1572 = vld [vmem:[#allocation6 + $0xa0] sm:$0xf]
    %v1573 = vld [vmem:[#allocation6 + $0xa4] sm:$0xf]
    %v1574 = vld [vmem:[#allocation6 + $0xa8] sm:$0xf]
    %v1575 = vld [vmem:[#allocation6 + $0xac] sm:$0xf]
    %v1576 = vld [vmem:[#allocation6 + $0xb0] sm:$0xf]
    %v1577 = vld [vmem:[#allocation6 + $0xb4] sm:$0xf]
    %v1578 = vld [vmem:[#allocation6 + $0xb8] sm:$0xf]
    %v1579 = vld [vmem:[#allocation6 + $0xbc] sm:$0xf]
    %v1580 = vld [vmem:[#allocation6 + $0xc0] sm:$0xf]
    %v1581 = vld [vmem:[#allocation6 + $0xc4] sm:$0xf]
    %v1582 = vld [vmem:[#allocation6 + $0xc8] sm:$0xf]
    %v1583 = vld [vmem:[#allocation6 + $0xcc] sm:$0xf]
    %v1584 = vld [vmem:[#allocation6 + $0xd0] sm:$0xf]
    %v1585 = vld [vmem:[#allocation6 + $0xd4] sm:$0xf]
    %v1586 = vld [vmem:[#allocation6 + $0xd8] sm:$0xf]
    %v1587 = vld [vmem:[#allocation6 + $0xdc] sm:$0xf]
    %v1588 = vld [vmem:[#allocation6 + $0xe0] sm:$0xf]
    %v1589 = vld [vmem:[#allocation6 + $0xe4] sm:$0xf]
    %v1590 = vld [vmem:[#allocation6 + $0xe8] sm:$0xf]
    %v1591 = vld [vmem:[#allocation6 + $0xec] sm:$0xf]
    %v1592 = vld [vmem:[#allocation6 + $0xf0] sm:$0xf]
    %v1593 = vld [vmem:[#allocation6 + $0xf4] sm:$0xf]
    %v1594 = vld [vmem:[#allocation6 + $0xf8] sm:$0xf]
    %v1595 = vld [vmem:[#allocation6 + $0xfc] sm:$0xf]
    %v1660 = vunpack.c.l.b16 %v1532
    %v1661 = vunpack.c.l.b16 %v1533
    %v1662 = vunpack.c.l.b16 %v1534
    %v1663 = vunpack.c.l.b16 %v1535
    %v1664 = vunpack.c.l.b16 %v1536
    %v1665 = vunpack.c.l.b16 %v1537
    %v1666 = vunpack.c.l.b16 %v1538
    %v1667 = vunpack.c.l.b16 %v1539
    %v1668 = vunpack.c.l.b16 %v1540
    %v1669 = vunpack.c.l.b16 %v1541
    %v1670 = vunpack.c.l.b16 %v1542
    %v1671 = vunpack.c.l.b16 %v1543
    %v1672 = vunpack.c.l.b16 %v1544
    %v1673 = vunpack.c.l.b16 %v1545
    %v1674 = vunpack.c.l.b16 %v1546
    %v1675 = vunpack.c.l.b16 %v1547
    %v1676 = vunpack.c.l.b16 %v1548
    %v1677 = vunpack.c.l.b16 %v1549
    %v1678 = vunpack.c.l.b16 %v1550
    %v1679 = vunpack.c.l.b16 %v1551
    %v1680 = vunpack.c.l.b16 %v1552
    %v1681 = vunpack.c.l.b16 %v1553
    %v1682 = vunpack.c.l.b16 %v1554
    %v1683 = vunpack.c.l.b16 %v1555
    %v1684 = vunpack.c.l.b16 %v1556
    %v1685 = vunpack.c.l.b16 %v1557
    %v1686 = vunpack.c.l.b16 %v1558
    %v1687 = vunpack.c.l.b16 %v1559
    %v1688 = vunpack.c.l.b16 %v1560
    %v1689 = vunpack.c.l.b16 %v1561
    %v1690 = vunpack.c.l.b16 %v1562
    %v1691 = vunpack.c.l.b16 %v1563
    %v1692 = vunpack.c.l.b16 %v1564
    %v1693 = vunpack.c.l.b16 %v1565
    %v1694 = vunpack.c.l.b16 %v1566
    %v1695 = vunpack.c.l.b16 %v1567
    %v1696 = vunpack.c.l.b16 %v1568
    %v1697 = vunpack.c.l.b16 %v1569
    %v1698 = vunpack.c.l.b16 %v1570
    %v1699 = vunpack.c.l.b16 %v1571
    %v1700 = vunpack.c.l.b16 %v1572
    %v1701 = vunpack.c.l.b16 %v1573
    %v1702 = vunpack.c.l.b16 %v1574
    %v1703 = vunpack.c.l.b16 %v1575
    %v1704 = vunpack.c.l.b16 %v1576
    %v1705 = vunpack.c.l.b16 %v1577
    %v1706 = vunpack.c.l.b16 %v1578
    %v1707 = vunpack.c.l.b16 %v1579
    %v1708 = vunpack.c.l.b16 %v1580
    %v1709 = vunpack.c.l.b16 %v1581
    %v1710 = vunpack.c.l.b16 %v1582
    %v1711 = vunpack.c.l.b16 %v1583
    %v1712 = vunpack.c.l.b16 %v1584
    %v1713 = vunpack.c.l.b16 %v1585
    %v1714 = vunpack.c.l.b16 %v1586
    %v1715 = vunpack.c.l.b16 %v1587
    %v1716 = vunpack.c.l.b16 %v1588
    %v1717 = vunpack.c.l.b16 %v1589
    %v1718 = vunpack.c.l.b16 %v1590
    %v1719 = vunpack.c.l.b16 %v1591
    %v1720 = vunpack.c.l.b16 %v1592
    %v1721 = vunpack.c.l.b16 %v1593
    %v1722 = vunpack.c.l.b16 %v1594
    %v1723 = vunpack.c.l.b16 %v1595
    %v1724 = vpack.c.b16 %v1661, %v1660
    %v1725 = vpack.c.b16 %v1663, %v1662
    %v1726 = vpack.c.b16 %v1665, %v1664
    %v1727 = vpack.c.b16 %v1667, %v1666
    %v1728 = vpack.c.b16 %v1669, %v1668
    %v1729 = vpack.c.b16 %v1671, %v1670
    %v1730 = vpack.c.b16 %v1673, %v1672
    %v1731 = vpack.c.b16 %v1675, %v1674
    %v1732 = vpack.c.b16 %v1677, %v1676
    %v1733 = vpack.c.b16 %v1679, %v1678
    %v1734 = vpack.c.b16 %v1681, %v1680
    %v1735 = vpack.c.b16 %v1683, %v1682
    %v1736 = vpack.c.b16 %v1685, %v1684
    %v1737 = vpack.c.b16 %v1687, %v1686
    %v1738 = vpack.c.b16 %v1689, %v1688
    %v1739 = vpack.c.b16 %v1691, %v1690
    %v1740 = vpack.c.b16 %v1693, %v1692
    %v1741 = vpack.c.b16 %v1695, %v1694
    %v1742 = vpack.c.b16 %v1697, %v1696
    %v1743 = vpack.c.b16 %v1699, %v1698
    %v1744 = vpack.c.b16 %v1701, %v1700
    %v1745 = vpack.c.b16 %v1703, %v1702
    %v1746 = vpack.c.b16 %v1705, %v1704
    %v1747 = vpack.c.b16 %v1707, %v1706
    %v1748 = vpack.c.b16 %v1709, %v1708
    %v1749 = vpack.c.b16 %v1711, %v1710
    %v1750 = vpack.c.b16 %v1713, %v1712
    %v1751 = vpack.c.b16 %v1715, %v1714
    %v1752 = vpack.c.b16 %v1717, %v1716
    %v1753 = vpack.c.b16 %v1719, %v1718
    %v1754 = vpack.c.b16 %v1721, %v1720
    %v1755 = vpack.c.b16 %v1723, %v1722
    %1788 = vmatprep.subr.bf16.mxu0 0
    %1789 = vmatpush1.bf16.msra.mxu0 %v1724
    %1790 = vmatprep.subr.bf16.mxu0 0
    %1791 = vmatpush1.bf16.msra.mxu0 %v1725
    %1792 = vmatprep.subr.bf16.mxu0 0
    %1793 = vmatpush1.bf16.msra.mxu0 %v1726
    %1794 = vmatprep.subr.bf16.mxu0 0
    %1795 = vmatpush1.bf16.msra.mxu0 %v1727
    %1796 = vmatprep.subr.bf16.mxu0 0
    %1797 = vmatpush1.bf16.msra.mxu0 %v1728
    %1798 = vmatprep.subr.bf16.mxu0 0
    %1799 = vmatpush1.bf16.msra.mxu0 %v1729
    %1800 = vmatprep.subr.bf16.mxu0 0
    %1801 = vmatpush1.bf16.msra.mxu0 %v1730
    %1802 = vmatprep.subr.bf16.mxu0 0
    %1803 = vmatpush1.bf16.msra.mxu0 %v1731
    %1804 = vmatprep.subr.bf16.mxu0 0
    %1805 = vmatpush1.bf16.msra.mxu0 %v1732
    %1806 = vmatprep.subr.bf16.mxu0 0
    %1807 = vmatpush1.bf16.msra.mxu0 %v1733
    %1808 = vmatprep.subr.bf16.mxu0 0
    %1809 = vmatpush1.bf16.msra.mxu0 %v1734
    %1810 = vmatprep.subr.bf16.mxu0 0
    %1811 = vmatpush1.bf16.msra.mxu0 %v1735
    %1812 = vmatprep.subr.bf16.mxu0 0
    %1813 = vmatpush1.bf16.msra.mxu0 %v1736
    %1814 = vmatprep.subr.bf16.mxu0 0
    %1815 = vmatpush1.bf16.msra.mxu0 %v1737
    %1816 = vmatprep.subr.bf16.mxu0 0
    %1817 = vmatpush1.bf16.msra.mxu0 %v1738
    %1818 = vmatprep.subr.bf16.mxu0 0
    %1819 = vmatpush1.bf16.msra.mxu0 %v1739
    %1820 = vmatprep.mubr.bf16.mxu0 %v1529
    %1821 = vmatmul.mubr.bf16.gmra.mrb[0].mxu0 %v1528
    %v1822 = vpop.f32.mrb[0].mxu0
    %v1823 = vadd.f32 0.0, %v1822
    %v1824 = vpop.f32.mrb[0].mxu0
    %v1825 = vpop.f32.mrb[0].mxu0
    %v1826 = vpop.f32.mrb[0].mxu0
    %1827 = vdwg.mxu0
    %1828 = vmatprep.subr.bf16.mxu0 0
    %1829 = vmatpush1.bf16.msra.mxu0 %v1740
    %1830 = vmatprep.subr.bf16.mxu0 0
    %1831 = vmatpush1.bf16.msra.mxu0 %v1741
    %1832 = vmatprep.subr.bf16.mxu0 0
    %1833 = vmatpush1.bf16.msra.mxu0 %v1742
    %1834 = vmatprep.subr.bf16.mxu0 0
    %1835 = vmatpush1.bf16.msra.mxu0 %v1743
    %1836 = vmatprep.subr.bf16.mxu0 0
    %1837 = vmatpush1.bf16.msra.mxu0 %v1744
    %1838 = vmatprep.subr.bf16.mxu0 0
    %1839 = vmatpush1.bf16.msra.mxu0 %v1745
    %1840 = vmatprep.subr.bf16.mxu0 0
    %1841 = vmatpush1.bf16.msra.mxu0 %v1746
    %1842 = vmatprep.subr.bf16.mxu0 0
    %1843 = vmatpush1.bf16.msra.mxu0 %v1747
    %1844 = vmatprep.subr.bf16.mxu0 0
    %1845 = vmatpush1.bf16.msra.mxu0 %v1748
    %1846 = vmatprep.subr.bf16.mxu0 0
    %1847 = vmatpush1.bf16.msra.mxu0 %v1749
    %1848 = vmatprep.subr.bf16.mxu0 0
    %1849 = vmatpush1.bf16.msra.mxu0 %v1750
    %1850 = vmatprep.subr.bf16.mxu0 0
    %1851 = vmatpush1.bf16.msra.mxu0 %v1751
    %1852 = vmatprep.subr.bf16.mxu0 0
    %1853 = vmatpush1.bf16.msra.mxu0 %v1752
    %1854 = vmatprep.subr.bf16.mxu0 0
    %1855 = vmatpush1.bf16.msra.mxu0 %v1753
    %1856 = vmatprep.subr.bf16.mxu0 0
    %1857 = vmatpush1.bf16.msra.mxu0 %v1754
    %1858 = vmatprep.subr.bf16.mxu0 0
    %1859 = vmatpush1.bf16.msra.mxu0 %v1755
    %1860 = vmatprep.mubr.bf16.mxu0 %v1531
    %1861 = vmatmul.mubr.bf16.gmra.mrb[0].mxu0 %v1530
    %v1862 = vpop.f32.mrb[0].mxu0
    %v1863 = vadd.f32 %v1823, %v1862
    %v1864 = vpop.f32.mrb[0].mxu0
    %v1865 = vpop.f32.mrb[0].mxu0
    %v1866 = vpop.f32.mrb[0].mxu0
    %1867 = vdwg.mxu0
    %v1868 = vld [vmem:[#allocation8] sm:$0xff]
    %v1869 = vld [vmem:[#allocation8 + $0x8] sm:$0xff]
    %v1870 = vld [vmem:[#allocation8 + $0x10] sm:$0xff]
    %v1871 = vld [vmem:[#allocation8 + $0x18] sm:$0xff]
    %v1872 = vld [vmem:[#allocation8 + $0x20] sm:$0xff]
    %v1873 = vld [vmem:[#allocation8 + $0x28] sm:$0xff]
    %v1874 = vld [vmem:[#allocation8 + $0x30] sm:$0xff]
    %v1875 = vld [vmem:[#allocation8 + $0x38] sm:$0xff]
    %v1876 = vld [vmem:[#allocation8 + $0x40] sm:$0xff]
    %v1877 = vld [vmem:[#allocation8 + $0x48] sm:$0xff]
    %v1878 = vld [vmem:[#allocation8 + $0x50] sm:$0xff]
    %v1879 = vld [vmem:[#allocation8 + $0x58] sm:$0xff]
    %v1880 = vld [vmem:[#allocation8 + $0x60] sm:$0xff]
    %v1881 = vld [vmem:[#allocation8 + $0x68] sm:$0xff]
    %v1882 = vld [vmem:[#allocation8 + $0x70] sm:$0xff]
    %v1883 = vld [vmem:[#allocation8 + $0x78] sm:$0xff]
    %v1884 = vld [vmem:[#allocation8 + $0x80] sm:$0xff]
    %v1885 = vld [vmem:[#allocation8 + $0x88] sm:$0xff]
    %v1886 = vld [vmem:[#allocation8 + $0x90] sm:$0xff]
    %v1887 = vld [vmem:[#allocation8 + $0x98] sm:$0xff]
    %v1888 = vld [vmem:[#allocation8 + $0xa0] sm:$0xff]
    %v1889 = vld [vmem:[#allocation8 + $0xa8] sm:$0xff]
    %v1890 = vld [vmem:[#allocation8 + $0xb0] sm:$0xff]
    %v1891 = vld [vmem:[#allocation8 + $0xb8] sm:$0xff]
    %v1892 = vld [vmem:[#allocation8 + $0xc0] sm:$0xff]
    %v1893 = vld [vmem:[#allocation8 + $0xc8] sm:$0xff]
    %v1894 = vld [vmem:[#allocation8 + $0xd0] sm:$0xff]
    %v1895 = vld [vmem:[#allocation8 + $0xd8] sm:$0xff]
    %v1896 = vld [vmem:[#allocation8 + $0xe0] sm:$0xff]
    %v1897 = vld [vmem:[#allocation8 + $0xe8] sm:$0xff]
    %v1898 = vld [vmem:[#allocation8 + $0xf0] sm:$0xff]
    %v1899 = vld [vmem:[#allocation8 + $0xf8] sm:$0xff]
    %v1900 = vld [vmem:[#allocation8 + $0x100] sm:$0xff]
    %v1901 = vld [vmem:[#allocation8 + $0x108] sm:$0xff]
    %v1902 = vld [vmem:[#allocation8 + $0x110] sm:$0xff]
    %v1903 = vld [vmem:[#allocation8 + $0x118] sm:$0xff]
    %v1904 = vld [vmem:[#allocation8 + $0x120] sm:$0xff]
    %v1905 = vld [vmem:[#allocation8 + $0x128] sm:$0xff]
    %v1906 = vld [vmem:[#allocation8 + $0x130] sm:$0xff]
    %v1907 = vld [vmem:[#allocation8 + $0x138] sm:$0xff]
    %v1908 = vld [vmem:[#allocation8 + $0x140] sm:$0xff]
    %v1909 = vld [vmem:[#allocation8 + $0x148] sm:$0xff]
    %v1910 = vld [vmem:[#allocation8 + $0x150] sm:$0xff]
    %v1911 = vld [vmem:[#allocation8 + $0x158] sm:$0xff]
    %v1912 = vld [vmem:[#allocation8 + $0x160] sm:$0xff]
    %v1913 = vld [vmem:[#allocation8 + $0x168] sm:$0xff]
    %v1914 = vld [vmem:[#allocation8 + $0x170] sm:$0xff]
    %v1915 = vld [vmem:[#allocation8 + $0x178] sm:$0xff]
    %v1916 = vld [vmem:[#allocation8 + $0x180] sm:$0xff]
    %v1917 = vld [vmem:[#allocation8 + $0x188] sm:$0xff]
    %v1918 = vld [vmem:[#allocation8 + $0x190] sm:$0xff]
    %v1919 = vld [vmem:[#allocation8 + $0x198] sm:$0xff]
    %v1920 = vld [vmem:[#allocation8 + $0x1a0] sm:$0xff]
    %v1921 = vld [vmem:[#allocation8 + $0x1a8] sm:$0xff]
    %v1922 = vld [vmem:[#allocation8 + $0x1b0] sm:$0xff]
    %v1923 = vld [vmem:[#allocation8 + $0x1b8] sm:$0xff]
    %v1924 = vld [vmem:[#allocation8 + $0x1c0] sm:$0xff]
    %v1925 = vld [vmem:[#allocation8 + $0x1c8] sm:$0xff]
    %v1926 = vld [vmem:[#allocation8 + $0x1d0] sm:$0xff]
    %v1927 = vld [vmem:[#allocation8 + $0x1d8] sm:$0xff]
    %v1928 = vld [vmem:[#allocation8 + $0x1e0] sm:$0xff]
    %v1929 = vld [vmem:[#allocation8 + $0x1e8] sm:$0xff]
    %v1930 = vld [vmem:[#allocation8 + $0x1f0] sm:$0xff]
    %v1931 = vld [vmem:[#allocation8 + $0x1f8] sm:$0xff]
    %1934 = vmatprep.subr.mxu0 0.0
    %1935 = vmatpush1.msra.mxu0 %v1868
    %1936 = vmatprep.subr.mxu0 0.0
    %1937 = vmatpush1.msra.mxu0 %v1869
    %1938 = vmatprep.subr.mxu0 0.0
    %1939 = vmatpush1.msra.mxu0 %v1870
    %1940 = vmatprep.subr.mxu0 0.0
    %1941 = vmatpush1.msra.mxu0 %v1871
    %1942 = vmatprep.subr.mxu0 0.0
    %1943 = vmatpush1.msra.mxu0 %v1872
    %1944 = vmatprep.subr.mxu0 0.0
    %1945 = vmatpush1.msra.mxu0 %v1873
    %1946 = vmatprep.subr.mxu0 0.0
    %1947 = vmatpush1.msra.mxu0 %v1874
    %1948 = vmatprep.subr.mxu0 0.0
    %1949 = vmatpush1.msra.mxu0 %v1875
    %1950 = vmatprep.subr.mxu0 0.0
    %1951 = vmatpush1.msra.mxu0 %v1876
    %1952 = vmatprep.subr.mxu0 0.0
    %1953 = vmatpush1.msra.mxu0 %v1877
    %1954 = vmatprep.subr.mxu0 0.0
    %1955 = vmatpush1.msra.mxu0 %v1878
    %1956 = vmatprep.subr.mxu0 0.0
    %1957 = vmatpush1.msra.mxu0 %v1879
    %1958 = vmatprep.subr.mxu0 0.0
    %1959 = vmatpush1.msra.mxu0 %v1880
    %1960 = vmatprep.subr.mxu0 0.0
    %1961 = vmatpush1.msra.mxu0 %v1881
    %1962 = vmatprep.subr.mxu0 0.0
    %1963 = vmatpush1.msra.mxu0 %v1882
    %1964 = vmatprep.subr.mxu0 0.0
    %1965 = vmatpush1.msra.mxu0 %v1883
    %1966 = vmatprep.subr.mxu0 0.0
    %1967 = vmatpush1.msra.mxu0 %v1884
    %1968 = vmatprep.subr.mxu0 0.0
    %1969 = vmatpush1.msra.mxu0 %v1885
    %1970 = vmatprep.subr.mxu0 0.0
    %1971 = vmatpush1.msra.mxu0 %v1886
    %1972 = vmatprep.subr.mxu0 0.0
    %1973 = vmatpush1.msra.mxu0 %v1887
    %1974 = vmatprep.subr.mxu0 0.0
    %1975 = vmatpush1.msra.mxu0 %v1888
    %1976 = vmatprep.subr.mxu0 0.0
    %1977 = vmatpush1.msra.mxu0 %v1889
    %1978 = vmatprep.subr.mxu0 0.0
    %1979 = vmatpush1.msra.mxu0 %v1890
    %1980 = vmatprep.subr.mxu0 0.0
    %1981 = vmatpush1.msra.mxu0 %v1891
    %1982 = vmatprep.subr.mxu0 0.0
    %1983 = vmatpush1.msra.mxu0 %v1892
    %1984 = vmatprep.subr.mxu0 0.0
    %1985 = vmatpush1.msra.mxu0 %v1893
    %1986 = vmatprep.subr.mxu0 0.0
    %1987 = vmatpush1.msra.mxu0 %v1894
    %1988 = vmatprep.subr.mxu0 0.0
    %1989 = vmatpush1.msra.mxu0 %v1895
    %1990 = vmatprep.subr.mxu0 0.0
    %1991 = vmatpush1.msra.mxu0 %v1896
    %1992 = vmatprep.subr.mxu0 0.0
    %1993 = vmatpush1.msra.mxu0 %v1897
    %1994 = vmatprep.subr.mxu0 0.0
    %1995 = vmatpush1.msra.mxu0 %v1898
    %1996 = vmatprep.subr.mxu0 0.0
    %1997 = vmatpush1.msra.mxu0 %v1899
    %1998 = vmatprep.mubr.f32.mxu0 %v113
    %1999 = vmatmul.mubr.f32.gmra.mrb[0].mxu0 %v89
    %v2000 = vpop.f32.mrb[0].mxu0
    %v2001 = vadd.f32 0.0, %v2000
    %v2002 = vpop.f32.mrb[0].mxu0
    %2003 = vdwg.mxu0
    %2004 = vmatprep.subr.mxu0 0.0
    %2005 = vmatpush1.msra.mxu0 %v1900
    %2006 = vmatprep.subr.mxu0 0.0
    %2007 = vmatpush1.msra.mxu0 %v1901
    %2008 = vmatprep.subr.mxu0 0.0
    %2009 = vmatpush1.msra.mxu0 %v1902
    %2010 = vmatprep.subr.mxu0 0.0
    %2011 = vmatpush1.msra.mxu0 %v1903
    %2012 = vmatprep.subr.mxu0 0.0
    %2013 = vmatpush1.msra.mxu0 %v1904
    %2014 = vmatprep.subr.mxu0 0.0
    %2015 = vmatpush1.msra.mxu0 %v1905
    %2016 = vmatprep.subr.mxu0 0.0
    %2017 = vmatpush1.msra.mxu0 %v1906
    %2018 = vmatprep.subr.mxu0 0.0
    %2019 = vmatpush1.msra.mxu0 %v1907
    %2020 = vmatprep.subr.mxu0 0.0
    %2021 = vmatpush1.msra.mxu0 %v1908
    %2022 = vmatprep.subr.mxu0 0.0
    %2023 = vmatpush1.msra.mxu0 %v1909
    %2024 = vmatprep.subr.mxu0 0.0
    %2025 = vmatpush1.msra.mxu0 %v1910
    %2026 = vmatprep.subr.mxu0 0.0
    %2027 = vmatpush1.msra.mxu0 %v1911
    %2028 = vmatprep.subr.mxu0 0.0
    %2029 = vmatpush1.msra.mxu0 %v1912
    %2030 = vmatprep.subr.mxu0 0.0
    %2031 = vmatpush1.msra.mxu0 %v1913
    %2032 = vmatprep.subr.mxu0 0.0
    %2033 = vmatpush1.msra.mxu0 %v1914
    %2034 = vmatprep.subr.mxu0 0.0
    %2035 = vmatpush1.msra.mxu0 %v1915
    %2036 = vmatprep.subr.mxu0 0.0
    %2037 = vmatpush1.msra.mxu0 %v1916
    %2038 = vmatprep.subr.mxu0 0.0
    %2039 = vmatpush1.msra.mxu0 %v1917
    %2040 = vmatprep.subr.mxu0 0.0
    %2041 = vmatpush1.msra.mxu0 %v1918
    %2042 = vmatprep.subr.mxu0 0.0
    %2043 = vmatpush1.msra.mxu0 %v1919
    %2044 = vmatprep.subr.mxu0 0.0
    %2045 = vmatpush1.msra.mxu0 %v1920
    %2046 = vmatprep.subr.mxu0 0.0
    %2047 = vmatpush1.msra.mxu0 %v1921
    %2048 = vmatprep.subr.mxu0 0.0
    %2049 = vmatpush1.msra.mxu0 %v1922
    %2050 = vmatprep.subr.mxu0 0.0
    %2051 = vmatpush1.msra.mxu0 %v1923
    %2052 = vmatprep.subr.mxu0 0.0
    %2053 = vmatpush1.msra.mxu0 %v1924
    %2054 = vmatprep.subr.mxu0 0.0
    %2055 = vmatpush1.msra.mxu0 %v1925
    %2056 = vmatprep.subr.mxu0 0.0
    %2057 = vmatpush1.msra.mxu0 %v1926
    %2058 = vmatprep.subr.mxu0 0.0
    %2059 = vmatpush1.msra.mxu0 %v1927
    %2060 = vmatprep.subr.mxu0 0.0
    %2061 = vmatpush1.msra.mxu0 %v1928
    %2062 = vmatprep.subr.mxu0 0.0
    %2063 = vmatpush1.msra.mxu0 %v1929
    %2064 = vmatprep.subr.mxu0 0.0
    %2065 = vmatpush1.msra.mxu0 %v1930
    %2066 = vmatprep.subr.mxu0 0.0
    %2067 = vmatpush1.msra.mxu0 %v1931
    %2068 = vmatprep.mubr.f32.mxu0 %v108
    %2069 = vmatmul.mubr.f32.gmra.mrb[0].mxu0 %v90
    %v2070 = vpop.f32.mrb[0].mxu0
    %v2071 = vadd.f32 %v2001, %v2070
    %v2072 = vpop.f32.mrb[0].mxu0
    %2073 = vdwg.mxu0
    %v2075 = vrot.slane %v2071, 4
    %v2077 = vsel %vm342, %v1863, %v2075
    %v2078 = vld [vmem:[%s6] sm:$0xff]
    %v2079 = vld [vmem:[%s7] sm:$0xff]
    %2081 = vset.pattern.permute.xlu0 0
    %2082 = vperm.xlu0 %2081, %v2079
    %v2083 = vpop.permute.xlu0 %2082
    %vm2085 = vcmask 64512
    %v2087 = vsel %vm2085, %v2078, 0
    %2089 = vmatprep.subr.mxu0 0.0
    %2090 = vmatpush1.msra.mxu0 %v2077
    %2091 = vmatprep.subr.mxu0 0.0
    %2092 = vmatpush1.msra.mxu0 0.0
    %2093 = vmatprep.subr.mxu0 0.0
    %2094 = vmatpush1.msra.mxu0 0.0
    %2095 = vmatprep.subr.mxu0 0.0
    %2096 = vmatpush1.msra.mxu0 0.0
    %2097 = vmatprep.subr.mxu0 0.0
    %2098 = vmatpush1.msra.mxu0 0.0
    %2099 = vmatprep.subr.mxu0 0.0
    %2100 = vmatpush1.msra.mxu0 0.0
    %2101 = vmatprep.subr.mxu0 0.0
    %2102 = vmatpush1.msra.mxu0 0.0
    %2103 = vmatprep.subr.mxu0 0.0
    %2104 = vmatpush1.msra.mxu0 0.0
    %2105 = vmatprep.subr.mxu0 0.0
    %2106 = vmatpush1.msra.mxu0 0.0
    %2107 = vmatprep.subr.mxu0 0.0
    %2108 = vmatpush1.msra.mxu0 0.0
    %2109 = vmatprep.subr.mxu0 0.0
    %2110 = vmatpush1.msra.mxu0 0.0
    %2111 = vmatprep.subr.mxu0 0.0
    %2112 = vmatpush1.msra.mxu0 0.0
    %2113 = vmatprep.subr.mxu0 0.0
    %2114 = vmatpush1.msra.mxu0 0.0
    %2115 = vmatprep.subr.mxu0 0.0
    %2116 = vmatpush1.msra.mxu0 0.0
    %2117 = vmatprep.subr.mxu0 0.0
    %2118 = vmatpush1.msra.mxu0 0.0
    %2119 = vmatprep.subr.mxu0 0.0
    %2120 = vmatpush1.msra.mxu0 0.0
    %2121 = vmatprep.subr.mxu0 0.0
    %2122 = vmatpush1.msra.mxu0 0.0
    %2123 = vmatprep.subr.mxu0 0.0
    %2124 = vmatpush1.msra.mxu0 0.0
    %2125 = vmatprep.subr.mxu0 0.0
    %2126 = vmatpush1.msra.mxu0 0.0
    %2127 = vmatprep.subr.mxu0 0.0
    %2128 = vmatpush1.msra.mxu0 0.0
    %2129 = vmatprep.subr.mxu0 0.0
    %2130 = vmatpush1.msra.mxu0 0.0
    %2131 = vmatprep.subr.mxu0 0.0
    %2132 = vmatpush1.msra.mxu0 0.0
    %2133 = vmatprep.subr.mxu0 0.0
    %2134 = vmatpush1.msra.mxu0 0.0
    %2135 = vmatprep.subr.mxu0 0.0
    %2136 = vmatpush1.msra.mxu0 0.0
    %2137 = vmatprep.subr.mxu0 0.0
    %2138 = vmatpush1.msra.mxu0 0.0
    %2139 = vmatprep.subr.mxu0 0.0
    %2140 = vmatpush1.msra.mxu0 0.0
    %2141 = vmatprep.subr.mxu0 0.0
    %2142 = vmatpush1.msra.mxu0 0.0
    %2143 = vmatprep.subr.mxu0 0.0
    %2144 = vmatpush1.msra.mxu0 0.0
    %2145 = vmatprep.subr.mxu0 0.0
    %2146 = vmatpush1.msra.mxu0 0.0
    %2147 = vmatprep.subr.mxu0 0.0
    %2148 = vmatpush1.msra.mxu0 0.0
    %2149 = vmatprep.subr.mxu0 0.0
    %2150 = vmatpush1.msra.mxu0 0.0
    %2151 = vmatprep.subr.mxu0 0.0
    %2152 = vmatpush1.msra.mxu0 0.0
    %2153 = vmatprep.mubr.f32.mxu0 0.0
    %2154 = vmatmul.mubr.f32.gmra.mrb[0].mxu0 %v2087
    %v2155 = vpop.f32.mrb[0].mxu0
    %v2156 = vadd.f32 %v2083, %v2155
    %v2157 = vpop.f32.mrb[0].mxu0
    %2158 = vdwg.mxu0
    %v2159 = vmax.f32 %v2156, 0.0
    %v2160 = vpack.c.bf16 %v2159, %v2159
    %v2161 = vld [vmem:[#allocation9] sm:$0xff]
    %v2162 = vld [vmem:[#allocation9 + $0x8] sm:$0xff]
    %v2163 = vld [vmem:[#allocation9 + $0x10] sm:$0xff]
    %v2164 = vld [vmem:[#allocation9 + $0x18] sm:$0xff]
    %v2165 = vld [vmem:[#allocation9 + $0x20] sm:$0xff]
    %v2166 = vld [vmem:[#allocation9 + $0x28] sm:$0xff]
    %v2167 = vld [vmem:[#allocation9 + $0x30] sm:$0xff]
    %v2168 = vld [vmem:[#allocation9 + $0x38] sm:$0xff]
    %v2169 = vld [vmem:[#allocation9 + $0x40] sm:$0xff]
    %v2170 = vld [vmem:[#allocation9 + $0x48] sm:$0xff]
    %v2171 = vld [vmem:[#allocation9 + $0x50] sm:$0xff]
    %v2172 = vld [vmem:[#allocation9 + $0x58] sm:$0xff]
    %v2173 = vld [vmem:[#allocation9 + $0x60] sm:$0xff]
    %v2174 = vld [vmem:[#allocation9 + $0x68] sm:$0xff]
    %v2175 = vld [vmem:[#allocation9 + $0x70] sm:$0xff]
    %v2176 = vld [vmem:[#allocation9 + $0x78] sm:$0xff]
    %v2177 = vld [vmem:[#allocation9 + $0x80] sm:$0xff]
    %v2178 = vld [vmem:[#allocation9 + $0x88] sm:$0xff]
    %v2179 = vld [vmem:[#allocation9 + $0x90] sm:$0xff]
    %v2180 = vld [vmem:[#allocation9 + $0x98] sm:$0xff]
    %v2181 = vld [vmem:[#allocation9 + $0xa0] sm:$0xff]
    %v2182 = vld [vmem:[#allocation9 + $0xa8] sm:$0xff]
    %v2183 = vld [vmem:[#allocation9 + $0xb0] sm:$0xff]
    %v2184 = vld [vmem:[#allocation9 + $0xb8] sm:$0xff]
    %v2185 = vld [vmem:[#allocation9 + $0xc0] sm:$0xff]
    %v2186 = vld [vmem:[#allocation9 + $0xc8] sm:$0xff]
    %v2187 = vld [vmem:[#allocation9 + $0xd0] sm:$0xff]
    %v2188 = vld [vmem:[#allocation9 + $0xd8] sm:$0xff]
    %v2189 = vld [vmem:[#allocation9 + $0xe0] sm:$0xff]
    %v2190 = vld [vmem:[#allocation9 + $0xe8] sm:$0xff]
    %v2191 = vld [vmem:[#allocation9 + $0xf0] sm:$0xff]
    %v2192 = vld [vmem:[#allocation9 + $0xf8] sm:$0xff]
    %v2225 = vunpack.c.l.b16 %v2161
    %v2226 = vunpack.c.h.b16 %v2161
    %v2227 = vunpack.c.l.b16 %v2162
    %v2228 = vunpack.c.h.b16 %v2162
    %v2229 = vunpack.c.l.b16 %v2163
    %v2230 = vunpack.c.h.b16 %v2163
    %v2231 = vunpack.c.l.b16 %v2164
    %v2232 = vunpack.c.h.b16 %v2164
    %v2233 = vunpack.c.l.b16 %v2165
    %v2234 = vunpack.c.h.b16 %v2165
    %v2235 = vunpack.c.l.b16 %v2166
    %v2236 = vunpack.c.h.b16 %v2166
    %v2237 = vunpack.c.l.b16 %v2167
    %v2238 = vunpack.c.h.b16 %v2167
    %v2239 = vunpack.c.l.b16 %v2168
    %v2240 = vunpack.c.h.b16 %v2168
    %v2241 = vunpack.c.l.b16 %v2169
    %v2242 = vunpack.c.h.b16 %v2169
    %v2243 = vunpack.c.l.b16 %v2170
    %v2244 = vunpack.c.h.b16 %v2170
    %v2245 = vunpack.c.l.b16 %v2171
    %v2246 = vunpack.c.h.b16 %v2171
    %v2247 = vunpack.c.l.b16 %v2172
    %v2248 = vunpack.c.h.b16 %v2172
    %v2249 = vunpack.c.l.b16 %v2173
    %v2250 = vunpack.c.h.b16 %v2173
    %v2251 = vunpack.c.l.b16 %v2174
    %v2252 = vunpack.c.h.b16 %v2174
    %v2253 = vunpack.c.l.b16 %v2175
    %v2254 = vunpack.c.h.b16 %v2175
    %v2255 = vunpack.c.l.b16 %v2176
    %v2256 = vunpack.c.h.b16 %v2176
    %v2257 = vunpack.c.l.b16 %v2177
    %v2258 = vunpack.c.h.b16 %v2177
    %v2259 = vunpack.c.l.b16 %v2178
    %v2260 = vunpack.c.h.b16 %v2178
    %v2261 = vunpack.c.l.b16 %v2179
    %v2262 = vunpack.c.h.b16 %v2179
    %v2263 = vunpack.c.l.b16 %v2180
    %v2264 = vunpack.c.h.b16 %v2180
    %v2265 = vunpack.c.l.b16 %v2181
    %v2266 = vunpack.c.h.b16 %v2181
    %v2267 = vunpack.c.l.b16 %v2182
    %v2268 = vunpack.c.h.b16 %v2182
    %v2269 = vunpack.c.l.b16 %v2183
    %v2270 = vunpack.c.h.b16 %v2183
    %v2271 = vunpack.c.l.b16 %v2184
    %v2272 = vunpack.c.h.b16 %v2184
    %v2273 = vunpack.c.l.b16 %v2185
    %v2274 = vunpack.c.h.b16 %v2185
    %v2275 = vunpack.c.l.b16 %v2186
    %v2276 = vunpack.c.h.b16 %v2186
    %v2277 = vunpack.c.l.b16 %v2187
    %v2278 = vunpack.c.h.b16 %v2187
    %v2279 = vunpack.c.l.b16 %v2188
    %v2280 = vunpack.c.h.b16 %v2188
    %v2281 = vunpack.c.l.b16 %v2189
    %v2282 = vunpack.c.h.b16 %v2189
    %v2283 = vunpack.c.l.b16 %v2190
    %v2284 = vunpack.c.h.b16 %v2190
    %v2285 = vunpack.c.l.b16 %v2191
    %v2286 = vunpack.c.h.b16 %v2191
    %v2287 = vunpack.c.l.b16 %v2192
    %v2288 = vunpack.c.h.b16 %v2192
    %v2289 = vpack.c.b16 %v2229, %v2225
    %v2290 = vpack.c.b16 %v2230, %v2226
    %v2291 = vpack.c.b16 %v2231, %v2227
    %v2292 = vpack.c.b16 %v2232, %v2228
    %v2293 = vpack.c.b16 %v2237, %v2233
    %v2294 = vpack.c.b16 %v2238, %v2234
    %v2295 = vpack.c.b16 %v2239, %v2235
    %v2296 = vpack.c.b16 %v2240, %v2236
    %v2297 = vpack.c.b16 %v2245, %v2241
    %v2298 = vpack.c.b16 %v2246, %v2242
    %v2299 = vpack.c.b16 %v2247, %v2243
    %v2300 = vpack.c.b16 %v2248, %v2244
    %v2301 = vpack.c.b16 %v2253, %v2249
    %v2302 = vpack.c.b16 %v2254, %v2250
    %v2303 = vpack.c.b16 %v2255, %v2251
    %v2304 = vpack.c.b16 %v2256, %v2252
    %v2305 = vpack.c.b16 %v2261, %v2257
    %v2306 = vpack.c.b16 %v2262, %v2258
    %v2307 = vpack.c.b16 %v2263, %v2259
    %v2308 = vpack.c.b16 %v2264, %v2260
    %v2309 = vpack.c.b16 %v2269, %v2265
    %v2310 = vpack.c.b16 %v2270, %v2266
    %v2311 = vpack.c.b16 %v2271, %v2267
    %v2312 = vpack.c.b16 %v2272, %v2268
    %v2313 = vpack.c.b16 %v2277, %v2273
    %v2314 = vpack.c.b16 %v2278, %v2274
    %v2315 = vpack.c.b16 %v2279, %v2275
    %v2316 = vpack.c.b16 %v2280, %v2276
    %v2317 = vpack.c.b16 %v2285, %v2281
    %v2318 = vpack.c.b16 %v2286, %v2282
    %v2319 = vpack.c.b16 %v2287, %v2283
    %v2320 = vpack.c.b16 %v2288, %v2284
    %2353 = vmatprep.subr.bf16.mxu0 %v2290
    %2354 = vmatpush1.bf16.msra.mxu0 %v2289
    %2355 = vmatprep.subr.bf16.mxu0 %v2294
    %2356 = vmatpush1.bf16.msra.mxu0 %v2293
    %2357 = vmatprep.subr.bf16.mxu0 %v2298
    %2358 = vmatpush1.bf16.msra.mxu0 %v2297
    %2359 = vmatprep.subr.bf16.mxu0 %v2302
    %2360 = vmatpush1.bf16.msra.mxu0 %v2301
    %2361 = vmatprep.subr.bf16.mxu0 %v2306
    %2362 = vmatpush1.bf16.msra.mxu0 %v2305
    %2363 = vmatprep.subr.bf16.mxu0 %v2310
    %2364 = vmatpush1.bf16.msra.mxu0 %v2309
    %2365 = vmatprep.subr.bf16.mxu0 %v2314
    %2366 = vmatpush1.bf16.msra.mxu0 %v2313
    %2367 = vmatprep.subr.bf16.mxu0 %v2318
    %2368 = vmatpush1.bf16.msra.mxu0 %v2317
    %2369 = vmatprep.subr.bf16.mxu0 0
    %2370 = vmatpush1.bf16.msra.mxu0 0
    %2371 = vmatprep.subr.bf16.mxu0 0
    %2372 = vmatpush1.bf16.msra.mxu0 0
    %2373 = vmatprep.subr.bf16.mxu0 0
    %2374 = vmatpush1.bf16.msra.mxu0 0
    %2375 = vmatprep.subr.bf16.mxu0 0
    %2376 = vmatpush1.bf16.msra.mxu0 0
    %2377 = vmatprep.subr.bf16.mxu0 0
    %2378 = vmatpush1.bf16.msra.mxu0 0
    %2379 = vmatprep.subr.bf16.mxu0 0
    %2380 = vmatpush1.bf16.msra.mxu0 0
    %2381 = vmatprep.subr.bf16.mxu0 0
    %2382 = vmatpush1.bf16.msra.mxu0 0
    %2383 = vmatprep.subr.bf16.mxu0 0
    %2384 = vmatpush1.bf16.msra.mxu0 0
    %2385 = vmatprep.mubr.bf16.mxu0 0
    %2386 = vmatmul.mubr.bf16.gmra.mrb[0].mxu0 %v2160
    %v2387 = vpop.f32.mrb[0].mxu0
    %v2388 = vadd.f32 0.0, %v2387
    %v2389 = vpop.f32.mrb[0].mxu0
    %v2390 = vadd.f32 0.0, %v2389
    %v2391 = vpop.f32.mrb[0].mxu0
    %v2392 = vpop.f32.mrb[0].mxu0
    %2393 = vdwg.mxu0
    %2394 = vmatprep.subr.bf16.mxu0 %v2292
    %2395 = vmatpush1.bf16.msra.mxu0 %v2291
    %2396 = vmatprep.subr.bf16.mxu0 %v2296
    %2397 = vmatpush1.bf16.msra.mxu0 %v2295
    %2398 = vmatprep.subr.bf16.mxu0 %v2300
    %2399 = vmatpush1.bf16.msra.mxu0 %v2299
    %2400 = vmatprep.subr.bf16.mxu0 %v2304
    %2401 = vmatpush1.bf16.msra.mxu0 %v2303
    %2402 = vmatprep.subr.bf16.mxu0 %v2308
    %2403 = vmatpush1.bf16.msra.mxu0 %v2307
    %2404 = vmatprep.subr.bf16.mxu0 %v2312
    %2405 = vmatpush1.bf16.msra.mxu0 %v2311
    %2406 = vmatprep.subr.bf16.mxu0 %v2316
    %2407 = vmatpush1.bf16.msra.mxu0 %v2315
    %2408 = vmatprep.subr.bf16.mxu0 %v2320
    %2409 = vmatpush1.bf16.msra.mxu0 %v2319
    %2410 = vmatprep.subr.bf16.mxu0 0
    %2411 = vmatpush1.bf16.msra.mxu0 0
    %2412 = vmatprep.subr.bf16.mxu0 0
    %2413 = vmatpush1.bf16.msra.mxu0 0
    %2414 = vmatprep.subr.bf16.mxu0 0
    %2415 = vmatpush1.bf16.msra.mxu0 0
    %2416 = vmatprep.subr.bf16.mxu0 0
    %2417 = vmatpush1.bf16.msra.mxu0 0
    %2418 = vmatprep.subr.bf16.mxu0 0
    %2419 = vmatpush1.bf16.msra.mxu0 0
    %2420 = vmatprep.subr.bf16.mxu0 0
    %2421 = vmatpush1.bf16.msra.mxu0 0
    %2422 = vmatprep.subr.bf16.mxu0 0
    %2423 = vmatpush1.bf16.msra.mxu0 0
    %2424 = vmatprep.subr.bf16.mxu0 0
    %2425 = vmatpush1.bf16.msra.mxu0 0
    %2426 = vmatprep.mubr.bf16.mxu0 0
    %2427 = vmatmul.mubr.bf16.gmra.mrb[0].mxu0 %v2160
    %v2428 = vpop.f32.mrb[0].mxu0
    %v2429 = vadd.f32 0.0, %v2428
    %v2430 = vpop.f32.mrb[0].mxu0
    %v2431 = vadd.f32 0.0, %v2430
    %v2432 = vpop.f32.mrb[0].mxu0
    %v2433 = vpop.f32.mrb[0].mxu0
    %2434 = vdwg.mxu0
    %2435 = vst [vmem:[#allocation11 + $0x60] sm:$0xff] %v2388
    %2436 = vst [vmem:[#allocation11 + $0x68] sm:$0xff] %v2390
    %2437 = vst [vmem:[#allocation11 + $0x70] sm:$0xff] %v2429
    %2438 = vst [vmem:[#allocation11 + $0x78] sm:$0xff] %v2431
    // Predicated region
    $region54: #{tpu_custom_call.1} parent=1 // pred_check
      _
    $region55: #{tpu_custom_call.1} parent=1 // pred_check_branch
      %2440 = sbr.rel (0) target = $region57
    $region56: #{tpu_custom_call.1} parent=1 // pred_region
      %s2442 = ssub.s32 2048, 2048
      %2443 = vsyncadd [#allocation5], %s2442
      %s2444 = sshll.u32 [#allocation11], 4
      %s2445 = int_to_ptr.vmem [resolvable:$true] %s2444
      %2450 = dma.vmem_to_hbm [thread:$0]  %s2445, 2048, %s9, [#allocation5], 512, 512, 32
    $region57: #{tpu_custom_call.1} parent=1 // pred_fallthru
      _
    // Predicated region
    $region58: #{tpu_custom_call.1} parent=1 // pred_check
      _
    $region59: #{tpu_custom_call.1} parent=1 // pred_check_branch
      %2452 = sbr.rel (0) target = $region61
    $region60: #{tpu_custom_call.1} parent=1 // pred_region
      %2453 = dma.done [#allocation5], 2048
    $region61: #{tpu_custom_call.1} parent=1 // pred_fallthru
      _
    %2454 = vsyncpa [#allocation4], 1
    %2455 = vsyncpa [#allocation7], 1
    %2456 = vsyncpa [#allocation10], 1
    %2457 = vsyncpa [#allocation5], 1

</llo_original>
